<compile_context>
chip_gen: v7x
topology: tpu7x:2x2x1
jax: 0.10.0
libtpu: 0.0.40
codegen_flags: <defaults>
</compile_context>

<pallas_src>
import functools

import jax
import jax.numpy as jnp
import numpy as np
from jax.experimental import pallas as pl
from jax.experimental.pallas import tpu as pltpu


# ---------------------------------------------------------------------------
# Fused kernel: 2 shared layers + concatenated head-L1 + block-diag head-L2.
# Ref layout: x, then per layer (wmu, wsig, eps_w, bmu, bsig, eps_b), out.
# Everything (weights, noise, activations) is VMEM-resident; one launch.
# ---------------------------------------------------------------------------
def fused_mtbnn_kernel(x_ref, *refs):
    o_ref = refs[-1]
    prm = refs[:-1]
    n_layers = len(prm) // 6
    h = x_ref[...]
    for li in range(n_layers):
        wmu, wsig, weps, bmu, bsig, beps = prm[6 * li:6 * li + 6]
        # Reparameterization in f32 on the VPU, fused with the MXU matmul.
        w = wmu[...] + wsig[...] * weps[...]          # (In, Out)
        b = bmu[...] + bsig[...] * beps[...]          # (1, Out)
        h = jnp.dot(h, w, preferred_element_type=jnp.float32) + b
        if li < n_layers - 1:                         # ReLU on all but final
            h = jnp.maximum(h, 0.0)
    o_ref[...] = h.astype(o_ref.dtype)


def _fused_call(x, layers, eps):
    """layers: list of (wmu, wsig, bmu, bsig) with weights stored (In, Out)."""
    B, in_dim = x.shape
    out_padded = layers[-1][0].shape[1]

    # Batch tiling: 1-D grid over rows; params/eps stay resident (constant
    # index_map), so per-tile VMEM footprint is bounded for any batch size.
    tb = B if B <= 1024 else 1024
    b_padded = ((B + tb - 1) // tb) * tb
    xp = x if b_padded == B else jnp.pad(x, ((0, b_padded - B), (0, 0)))
    grid = (b_padded // tb,)

    flat_args = [xp]
    in_specs = [pl.BlockSpec((tb, in_dim), lambda i: (i, 0))]
    for (wmu, wsig, bmu, bsig), ew, eb in zip(layers, eps[0::2], eps[1::2]):
        for arr in (wmu, wsig, ew, bmu, bsig, eb):
            flat_args.append(arr)
            in_specs.append(pl.BlockSpec(arr.shape, lambda i: (0, 0)))

    flops = 2 * b_padded * sum(w.shape[0] * w.shape[1] for (w, _, _, _) in layers)
    bytes_accessed = 4 * (sum(a.size for a in flat_args) + b_padded * out_padded)
    cost = pl.CostEstimate(flops=flops, transcendentals=0,
                           bytes_accessed=bytes_accessed)

    y = pl.pallas_call(
        fused_mtbnn_kernel,
        out_shape=jax.ShapeDtypeStruct((b_padded, out_padded), jnp.float32),
        grid=grid,
        in_specs=in_specs,
        out_specs=pl.BlockSpec((tb, out_padded), lambda i: (i, 0)),
        compiler_params=pltpu.CompilerParams(dimension_semantics=("parallel",)),
        cost_estimate=cost,
    )(*flat_args)
    return y[:B]


# ---------------------------------------------------------------------------
# Parameter init (matches LinearReparameterization.__init__ semantics; weights
# stored pre-transposed as (In, Out) so each layer is a natural MXU matmul):
#   weight_mu ~ kaiming_uniform(a=sqrt(5)) => U(-1/sqrt(fan_in), 1/sqrt(fan_in))
#   weight_rho = -5.0 ; bias_mu = 0.0 ; bias_rho = -5.0
# ---------------------------------------------------------------------------
def init_bayes_linear(key, in_f, out_f):
    bound = 1.0 / float(in_f) ** 0.5
    wmu = jax.random.uniform(key, (in_f, out_f), jnp.float32, -bound, bound)
    wrho = jnp.full((in_f, out_f), -5.0, jnp.float32)
    bmu = jnp.zeros((1, out_f), jnp.float32)
    brho = jnp.full((1, out_f), -5.0, jnp.float32)
    return dict(wmu=wmu, wrho=wrho, bmu=bmu, brho=brho)


def init_mtbnn_params(key, input_dim, reg_list, output_dims):
    keys = jax.random.split(key, 2 + 2 * len(reg_list))
    params = {
        "shared": [
            init_bayes_linear(keys[0], input_dim, 256),
            init_bayes_linear(keys[1], 256, 128),
        ],
        "heads": {},
    }
    for i, (task, out_dim) in enumerate(zip(reg_list, output_dims)):
        params["heads"][task] = [
            init_bayes_linear(keys[2 + 2 * i], 128, 64),
            init_bayes_linear(keys[3 + 2 * i], 64, out_dim),
        ]
    return params


def _block_diag(mats):
    rows = sum(m.shape[0] for m in mats)
    cols = sum(m.shape[1] for m in mats)
    out = jnp.zeros((rows, cols), mats[0].dtype)
    r = c = 0
    for m in mats:
        out = out.at[r:r + m.shape[0], c:c + m.shape[1]].set(m)
        r += m.shape[0]
        c += m.shape[1]
    return out


def prepare_fused_params(params, reg_list, output_dims, lane_pad=128):
    """Run ONCE per parameter update (NOT per forward).

    Applies softplus(rho) -> sigma, concatenates the head level-1 weights along
    Out, builds the block-diagonal head level-2 weights (sigma = 0 off-block,
    so no noise/information crosses tasks), and pads the final Out dimension
    to a lane-dense multiple of `lane_pad`.
    """
    sp = jax.nn.softplus
    layers = []
    for p in params["shared"]:
        layers.append((p["wmu"], sp(p["wrho"]), p["bmu"], sp(p["brho"])))
    heads = [params["heads"][t] for t in reg_list]
    # Head level 1: concatenate along Out -> single (128, 64*T) matmul.
    layers.append((
        jnp.concatenate([h[0]["wmu"] for h in heads], axis=1),
        jnp.concatenate([sp(h[0]["wrho"]) for h in heads], axis=1),
        jnp.concatenate([h[0]["bmu"] for h in heads], axis=1),
        jnp.concatenate([sp(h[0]["brho"]) for h in heads], axis=1),
    ))
    # Head level 2: block-diagonal (64*T, sum(out)), then pad columns.
    # TODO(synk): for very large task counts, loop per-head inside the kernel
    # instead of the O(T^2) zero-padded block-diagonal matmul.
    wmu4 = _block_diag([h[1]["wmu"] for h in heads])
    wsig4 = _block_diag([sp(h[1]["wrho"]) for h in heads])
    bmu4 = jnp.concatenate([h[1]["bmu"] for h in heads], axis=1)
    bsig4 = jnp.concatenate([sp(h[1]["brho"]) for h in heads], axis=1)
    sum_out = wmu4.shape[1]
    padded = ((sum_out + lane_pad - 1) // lane_pad) * lane_pad
    pad = padded - sum_out
    if pad:
        wmu4 = jnp.pad(wmu4, ((0, 0), (0, pad)))
        wsig4 = jnp.pad(wsig4, ((0, 0), (0, pad)))
        bmu4 = jnp.pad(bmu4, ((0, 0), (0, pad)))
        bsig4 = jnp.pad(bsig4, ((0, 0), (0, pad)))
    layers.append((wmu4, wsig4, bmu4, bsig4))
    return layers


# ---------------------------------------------------------------------------
# Per-forward path: draw eps, run the fused kernel, slice per-task outputs.
# ---------------------------------------------------------------------------
def _draw_eps(key, layers):
    keys = jax.random.split(key, 2 * len(layers))
    eps = []
    for i, (wmu, _, bmu, _) in enumerate(layers):
        eps.append(jax.random.normal(keys[2 * i], wmu.shape, wmu.dtype))
        eps.append(jax.random.normal(keys[2 * i + 1], bmu.shape, bmu.dtype))
    return eps


def _split_tasks(y, reg_list, output_dims):
    outputs = {}
    off = 0
    for t, d in zip(reg_list, output_dims):
        outputs[t] = y[:, off:off + d]
        off += d
    return outputs


def mtbnn_forward(fused_layers, x, key, *, reg_list, output_dims):
    eps = _draw_eps(key, fused_layers)
    y = _fused_call(x, fused_layers, eps)
    return _split_tasks(y, reg_list, output_dims)


def mtbnn_forward_reference(fused_layers, x, key, *, reg_list, output_dims):
    """Pure-JAX reference (same eps stream) for correctness checking."""
    eps = _draw_eps(key, fused_layers)
    h = x
    n = len(fused_layers)
    for li, (wmu, wsig, bmu, bsig) in enumerate(fused_layers):
        w = wmu + wsig * eps[2 * li]
        b = bmu + bsig * eps[2 * li + 1]
        h = h @ w + b
        if li < n - 1:
            h = jnp.maximum(h, 0.0)
    return _split_tasks(h, reg_list, output_dims)


def make_forward(reg_list, output_dims):
    reg_list = tuple(reg_list)
    output_dims = tuple(int(d) for d in output_dims)
    fn = functools.partial(mtbnn_forward, reg_list=reg_list,
                           output_dims=output_dims)
    return jax.jit(fn)


if __name__ == "__main__":
    key = jax.random.PRNGKey(0)
    k_param, k_x, k_eps = jax.random.split(key, 3)

    input_dim = 32
    batch = 8
    reg_list = ["task_a", "task_b"]
    output_dims = [1, 3]

    params = init_mtbnn_params(k_param, input_dim, reg_list, output_dims)
    fused = prepare_fused_params(params, reg_list, output_dims)   # once / update
    x = jax.random.normal(k_x, (batch, input_dim), jnp.float32)

    forward = make_forward(reg_list, output_dims)
    outputs = forward(fused, x, k_eps)            # fresh weight sample per call
    outputs = jax.tree_util.tree_map(jax.block_until_ready, outputs)

    # Shape / finiteness sanity.
    assert outputs["task_a"].shape == (batch, 1)
    assert outputs["task_b"].shape == (batch, 3)
    assert all(bool(jnp.all(jnp.isfinite(v))) for v in outputs.values())

    # Numerical check against a pure-JAX reference using the same eps stream.
    ref = mtbnn_forward_reference(fused, x, k_eps, reg_list=reg_list,
                                  output_dims=output_dims)
    for t in reg_list:
        np.testing.assert_allclose(np.asarray(outputs[t]), np.asarray(ref[t]),
                                   rtol=2e-2, atol=2e-2)

    print("KERNEL_OK")
</pallas_src>

<mosaic_0001>
module attributes {stable_mosaic.version = 11 : i64} {
  func.func @fused_mtbnn_kernel(%arg0: i32, %arg1: memref<8x32xf32, #tpu.memory_space<vmem>>, %arg2: memref<32x256xf32, #tpu.memory_space<vmem>>, %arg3: memref<32x256xf32, #tpu.memory_space<vmem>>, %arg4: memref<32x256xf32, #tpu.memory_space<vmem>>, %arg5: memref<1x256xf32, #tpu.memory_space<vmem>>, %arg6: memref<1x256xf32, #tpu.memory_space<vmem>>, %arg7: memref<1x256xf32, #tpu.memory_space<vmem>>, %arg8: memref<256x128xf32, #tpu.memory_space<vmem>>, %arg9: memref<256x128xf32, #tpu.memory_space<vmem>>, %arg10: memref<256x128xf32, #tpu.memory_space<vmem>>, %arg11: memref<1x128xf32, #tpu.memory_space<vmem>>, %arg12: memref<1x128xf32, #tpu.memory_space<vmem>>, %arg13: memref<1x128xf32, #tpu.memory_space<vmem>>, %arg14: memref<128x128xf32, #tpu.memory_space<vmem>>, %arg15: memref<128x128xf32, #tpu.memory_space<vmem>>, %arg16: memref<128x128xf32, #tpu.memory_space<vmem>>, %arg17: memref<1x128xf32, #tpu.memory_space<vmem>>, %arg18: memref<1x128xf32, #tpu.memory_space<vmem>>, %arg19: memref<1x128xf32, #tpu.memory_space<vmem>>, %arg20: memref<128x128xf32, #tpu.memory_space<vmem>>, %arg21: memref<128x128xf32, #tpu.memory_space<vmem>>, %arg22: memref<128x128xf32, #tpu.memory_space<vmem>>, %arg23: memref<1x128xf32, #tpu.memory_space<vmem>>, %arg24: memref<1x128xf32, #tpu.memory_space<vmem>>, %arg25: memref<1x128xf32, #tpu.memory_space<vmem>>, %arg26: memref<8x128xf32, #tpu.memory_space<vmem>>) attributes {dimension_semantics = [#tpu.dimension_semantics<parallel>], iteration_bounds = array<i64: 1>, scalar_prefetch = 0 : i64, scratch_operands = 0 : i64, tpu.core_type = #tpu.core_type<tc>, window_params = [{transform_indices = @transform_0, window_bounds = array<i64: 8, 32>}, {pipeline_mode = #tpu.pipeline_mode<synchronous>, transform_indices = @transform_1, window_bounds = array<i64: 32, 256>}, {pipeline_mode = #tpu.pipeline_mode<synchronous>, transform_indices = @transform_2, window_bounds = array<i64: 32, 256>}, {pipeline_mode = #tpu.pipeline_mode<synchronous>, transform_indices = @transform_3, window_bounds = array<i64: 32, 256>}, {pipeline_mode = #tpu.pipeline_mode<synchronous>, transform_indices = @transform_4, window_bounds = array<i64: 1, 256>}, {pipeline_mode = #tpu.pipeline_mode<synchronous>, transform_indices = @transform_5, window_bounds = array<i64: 1, 256>}, {pipeline_mode = #tpu.pipeline_mode<synchronous>, transform_indices = @transform_6, window_bounds = array<i64: 1, 256>}, {pipeline_mode = #tpu.pipeline_mode<synchronous>, transform_indices = @transform_7, window_bounds = array<i64: 256, 128>}, {pipeline_mode = #tpu.pipeline_mode<synchronous>, transform_indices = @transform_8, window_bounds = array<i64: 256, 128>}, {pipeline_mode = #tpu.pipeline_mode<synchronous>, transform_indices = @transform_9, window_bounds = array<i64: 256, 128>}, {pipeline_mode = #tpu.pipeline_mode<synchronous>, transform_indices = @transform_10, window_bounds = array<i64: 1, 128>}, {pipeline_mode = #tpu.pipeline_mode<synchronous>, transform_indices = @transform_11, window_bounds = array<i64: 1, 128>}, {pipeline_mode = #tpu.pipeline_mode<synchronous>, transform_indices = @transform_12, window_bounds = array<i64: 1, 128>}, {pipeline_mode = #tpu.pipeline_mode<synchronous>, transform_indices = @transform_13, window_bounds = array<i64: 128, 128>}, {pipeline_mode = #tpu.pipeline_mode<synchronous>, transform_indices = @transform_14, window_bounds = array<i64: 128, 128>}, {pipeline_mode = #tpu.pipeline_mode<synchronous>, transform_indices = @transform_15, window_bounds = array<i64: 128, 128>}, {pipeline_mode = #tpu.pipeline_mode<synchronous>, transform_indices = @transform_16, window_bounds = array<i64: 1, 128>}, {pipeline_mode = #tpu.pipeline_mode<synchronous>, transform_indices = @transform_17, window_bounds = array<i64: 1, 128>}, {pipeline_mode = #tpu.pipeline_mode<synchronous>, transform_indices = @transform_18, window_bounds = array<i64: 1, 128>}, {pipeline_mode = #tpu.pipeline_mode<synchronous>, transform_indices = @transform_19, window_bounds = array<i64: 128, 128>}, {pipeline_mode = #tpu.pipeline_mode<synchronous>, transform_indices = @transform_20, window_bounds = array<i64: 128, 128>}, {pipeline_mode = #tpu.pipeline_mode<synchronous>, transform_indices = @transform_21, window_bounds = array<i64: 128, 128>}, {pipeline_mode = #tpu.pipeline_mode<synchronous>, transform_indices = @transform_22, window_bounds = array<i64: 1, 128>}, {pipeline_mode = #tpu.pipeline_mode<synchronous>, transform_indices = @transform_23, window_bounds = array<i64: 1, 128>}, {pipeline_mode = #tpu.pipeline_mode<synchronous>, transform_indices = @transform_24, window_bounds = array<i64: 1, 128>}, {transform_indices = @transform_25, window_bounds = array<i64: 8, 128>}]} {
    %c0 = arith.constant 0 : index
    %c0_0 = arith.constant 0 : index
    %0 = vector.load %arg1[%c0, %c0_0] : memref<8x32xf32, #tpu.memory_space<vmem>>, vector<8x32xf32>
    %c0_1 = arith.constant 0 : index
    %c0_2 = arith.constant 0 : index
    %1 = vector.load %arg2[%c0_1, %c0_2] : memref<32x256xf32, #tpu.memory_space<vmem>>, vector<32x256xf32>
    %c0_3 = arith.constant 0 : index
    %c0_4 = arith.constant 0 : index
    %2 = vector.load %arg3[%c0_3, %c0_4] : memref<32x256xf32, #tpu.memory_space<vmem>>, vector<32x256xf32>
    %c0_5 = arith.constant 0 : index
    %c0_6 = arith.constant 0 : index
    %3 = vector.load %arg4[%c0_5, %c0_6] : memref<32x256xf32, #tpu.memory_space<vmem>>, vector<32x256xf32>
    %4 = arith.mulf %2, %3 : vector<32x256xf32>
    %5 = arith.addf %1, %4 : vector<32x256xf32>
    %c0_7 = arith.constant 0 : index
    %c0_8 = arith.constant 0 : index
    %6 = vector.load %arg5[%c0_7, %c0_8] : memref<1x256xf32, #tpu.memory_space<vmem>>, vector<1x256xf32>
    %c0_9 = arith.constant 0 : index
    %c0_10 = arith.constant 0 : index
    %7 = vector.load %arg6[%c0_9, %c0_10] : memref<1x256xf32, #tpu.memory_space<vmem>>, vector<1x256xf32>
    %c0_11 = arith.constant 0 : index
    %c0_12 = arith.constant 0 : index
    %8 = vector.load %arg7[%c0_11, %c0_12] : memref<1x256xf32, #tpu.memory_space<vmem>>, vector<1x256xf32>
    %9 = arith.mulf %7, %8 : vector<1x256xf32>
    %10 = arith.addf %6, %9 : vector<1x256xf32>
    %cst = arith.constant dense<0.000000e+00> : vector<8x256xf32>
    %11 = tpu.matmul %0, %5, %cst {dimension_numbers = #tpu.dot_dimension_numbers<[1], [0], [0], [1], [0, 0, 1, 1], [], []>} : vector<8x32xf32>, vector<32x256xf32>, vector<8x256xf32> -> vector<8x256xf32>
    %12 = vector.broadcast %10 : vector<1x256xf32> to vector<8x256xf32>
    %13 = arith.addf %11, %12 : vector<8x256xf32>
    %cst_13 = arith.constant 0.000000e+00 : f32
    %14 = vector.broadcast %cst_13 : f32 to vector<8x256xf32>
    %15 = arith.maximumf %13, %14 : vector<8x256xf32>
    %c0_14 = arith.constant 0 : index
    %c0_15 = arith.constant 0 : index
    %16 = vector.load %arg8[%c0_14, %c0_15] : memref<256x128xf32, #tpu.memory_space<vmem>>, vector<256x128xf32>
    %c0_16 = arith.constant 0 : index
    %c0_17 = arith.constant 0 : index
    %17 = vector.load %arg9[%c0_16, %c0_17] : memref<256x128xf32, #tpu.memory_space<vmem>>, vector<256x128xf32>
    %c0_18 = arith.constant 0 : index
    %c0_19 = arith.constant 0 : index
    %18 = vector.load %arg10[%c0_18, %c0_19] : memref<256x128xf32, #tpu.memory_space<vmem>>, vector<256x128xf32>
    %19 = arith.mulf %17, %18 : vector<256x128xf32>
    %20 = arith.addf %16, %19 : vector<256x128xf32>
    %c0_20 = arith.constant 0 : index
    %c0_21 = arith.constant 0 : index
    %21 = vector.load %arg11[%c0_20, %c0_21] : memref<1x128xf32, #tpu.memory_space<vmem>>, vector<1x128xf32>
    %c0_22 = arith.constant 0 : index
    %c0_23 = arith.constant 0 : index
    %22 = vector.load %arg12[%c0_22, %c0_23] : memref<1x128xf32, #tpu.memory_space<vmem>>, vector<1x128xf32>
    %c0_24 = arith.constant 0 : index
    %c0_25 = arith.constant 0 : index
    %23 = vector.load %arg13[%c0_24, %c0_25] : memref<1x128xf32, #tpu.memory_space<vmem>>, vector<1x128xf32>
    %24 = arith.mulf %22, %23 : vector<1x128xf32>
    %25 = arith.addf %21, %24 : vector<1x128xf32>
    %cst_26 = arith.constant dense<0.000000e+00> : vector<8x128xf32>
    %26 = tpu.matmul %15, %20, %cst_26 {dimension_numbers = #tpu.dot_dimension_numbers<[1], [0], [0], [1], [0, 0, 1, 1], [], []>} : vector<8x256xf32>, vector<256x128xf32>, vector<8x128xf32> -> vector<8x128xf32>
    %27 = vector.broadcast %25 : vector<1x128xf32> to vector<8x128xf32>
    %28 = arith.addf %26, %27 : vector<8x128xf32>
    %cst_27 = arith.constant 0.000000e+00 : f32
    %29 = vector.broadcast %cst_27 : f32 to vector<8x128xf32>
    %30 = arith.maximumf %28, %29 : vector<8x128xf32>
    %c0_28 = arith.constant 0 : index
    %c0_29 = arith.constant 0 : index
    %31 = vector.load %arg14[%c0_28, %c0_29] : memref<128x128xf32, #tpu.memory_space<vmem>>, vector<128x128xf32>
    %c0_30 = arith.constant 0 : index
    %c0_31 = arith.constant 0 : index
    %32 = vector.load %arg15[%c0_30, %c0_31] : memref<128x128xf32, #tpu.memory_space<vmem>>, vector<128x128xf32>
    %c0_32 = arith.constant 0 : index
    %c0_33 = arith.constant 0 : index
    %33 = vector.load %arg16[%c0_32, %c0_33] : memref<128x128xf32, #tpu.memory_space<vmem>>, vector<128x128xf32>
    %34 = arith.mulf %32, %33 : vector<128x128xf32>
    %35 = arith.addf %31, %34 : vector<128x128xf32>
    %c0_34 = arith.constant 0 : index
    %c0_35 = arith.constant 0 : index
    %36 = vector.load %arg17[%c0_34, %c0_35] : memref<1x128xf32, #tpu.memory_space<vmem>>, vector<1x128xf32>
    %c0_36 = arith.constant 0 : index
    %c0_37 = arith.constant 0 : index
    %37 = vector.load %arg18[%c0_36, %c0_37] : memref<1x128xf32, #tpu.memory_space<vmem>>, vector<1x128xf32>
    %c0_38 = arith.constant 0 : index
    %c0_39 = arith.constant 0 : index
    %38 = vector.load %arg19[%c0_38, %c0_39] : memref<1x128xf32, #tpu.memory_space<vmem>>, vector<1x128xf32>
    %39 = arith.mulf %37, %38 : vector<1x128xf32>
    %40 = arith.addf %36, %39 : vector<1x128xf32>
    %cst_40 = arith.constant dense<0.000000e+00> : vector<8x128xf32>
    %41 = tpu.matmul %30, %35, %cst_40 {dimension_numbers = #tpu.dot_dimension_numbers<[1], [0], [0], [1], [0, 0, 1, 1], [], []>} : vector<8x128xf32>, vector<128x128xf32>, vector<8x128xf32> -> vector<8x128xf32>
    %42 = vector.broadcast %40 : vector<1x128xf32> to vector<8x128xf32>
    %43 = arith.addf %41, %42 : vector<8x128xf32>
    %cst_41 = arith.constant 0.000000e+00 : f32
    %44 = vector.broadcast %cst_41 : f32 to vector<8x128xf32>
    %45 = arith.maximumf %43, %44 : vector<8x128xf32>
    %c0_42 = arith.constant 0 : index
    %c0_43 = arith.constant 0 : index
    %46 = vector.load %arg20[%c0_42, %c0_43] : memref<128x128xf32, #tpu.memory_space<vmem>>, vector<128x128xf32>
    %c0_44 = arith.constant 0 : index
    %c0_45 = arith.constant 0 : index
    %47 = vector.load %arg21[%c0_44, %c0_45] : memref<128x128xf32, #tpu.memory_space<vmem>>, vector<128x128xf32>
    %c0_46 = arith.constant 0 : index
    %c0_47 = arith.constant 0 : index
    %48 = vector.load %arg22[%c0_46, %c0_47] : memref<128x128xf32, #tpu.memory_space<vmem>>, vector<128x128xf32>
    %49 = arith.mulf %47, %48 : vector<128x128xf32>
    %50 = arith.addf %46, %49 : vector<128x128xf32>
    %c0_48 = arith.constant 0 : index
    %c0_49 = arith.constant 0 : index
    %51 = vector.load %arg23[%c0_48, %c0_49] : memref<1x128xf32, #tpu.memory_space<vmem>>, vector<1x128xf32>
    %c0_50 = arith.constant 0 : index
    %c0_51 = arith.constant 0 : index
    %52 = vector.load %arg24[%c0_50, %c0_51] : memref<1x128xf32, #tpu.memory_space<vmem>>, vector<1x128xf32>
    %c0_52 = arith.constant 0 : index
    %c0_53 = arith.constant 0 : index
    %53 = vector.load %arg25[%c0_52, %c0_53] : memref<1x128xf32, #tpu.memory_space<vmem>>, vector<1x128xf32>
    %54 = arith.mulf %52, %53 : vector<1x128xf32>
    %55 = arith.addf %51, %54 : vector<1x128xf32>
    %cst_54 = arith.constant dense<0.000000e+00> : vector<8x128xf32>
    %56 = tpu.matmul %45, %50, %cst_54 {dimension_numbers = #tpu.dot_dimension_numbers<[1], [0], [0], [1], [0, 0, 1, 1], [], []>} : vector<8x128xf32>, vector<128x128xf32>, vector<8x128xf32> -> vector<8x128xf32>
    %57 = vector.broadcast %55 : vector<1x128xf32> to vector<8x128xf32>
    %58 = arith.addf %56, %57 : vector<8x128xf32>
    %c0_55 = arith.constant 0 : index
    %c0_56 = arith.constant 0 : index
    %59 = vector.load %arg26[%c0_55, %c0_56] : memref<8x128xf32, #tpu.memory_space<vmem>>, vector<8x128xf32>
    tpu.vector_store %arg26[%c0_55, %c0_56], %58 {strides = array<i32>} : memref<8x128xf32, #tpu.memory_space<vmem>>, vector<8x128xf32>,
    return
  }
  func.func @transform_0(%arg0: i32) -> (i32, i32) {
    %c0_i32 = arith.constant 0 : i32
    %c0_i32_0 = arith.constant 0 : i32
    return %arg0, %c0_i32 : i32, i32
  }
  func.func @transform_1(%arg0: i32) -> (i32, i32) {
    %c0_i32 = arith.constant 0 : i32
    %c0_i32_0 = arith.constant 0 : i32
    %c0_i32_1 = arith.constant 0 : i32
    return %c0_i32, %c0_i32_0 : i32, i32
  }
  func.func @transform_2(%arg0: i32) -> (i32, i32) {
    %c0_i32 = arith.constant 0 : i32
    %c0_i32_0 = arith.constant 0 : i32
    %c0_i32_1 = arith.constant 0 : i32
    return %c0_i32, %c0_i32_0 : i32, i32
  }
  func.func @transform_3(%arg0: i32) -> (i32, i32) {
    %c0_i32 = arith.constant 0 : i32
    %c0_i32_0 = arith.constant 0 : i32
    %c0_i32_1 = arith.constant 0 : i32
    return %c0_i32, %c0_i32_0 : i32, i32
  }
  func.func @transform_4(%arg0: i32) -> (i32, i32) {
    %c0_i32 = arith.constant 0 : i32
    %c0_i32_0 = arith.constant 0 : i32
    %c0_i32_1 = arith.constant 0 : i32
    return %c0_i32, %c0_i32_0 : i32, i32
  }
  func.func @transform_5(%arg0: i32) -> (i32, i32) {
    %c0_i32 = arith.constant 0 : i32
    %c0_i32_0 = arith.constant 0 : i32
    %c0_i32_1 = arith.constant 0 : i32
    return %c0_i32, %c0_i32_0 : i32, i32
  }
  func.func @transform_6(%arg0: i32) -> (i32, i32) {
    %c0_i32 = arith.constant 0 : i32
    %c0_i32_0 = arith.constant 0 : i32
    %c0_i32_1 = arith.constant 0 : i32
    return %c0_i32, %c0_i32_0 : i32, i32
  }
  func.func @transform_7(%arg0: i32) -> (i32, i32) {
    %c0_i32 = arith.constant 0 : i32
    %c0_i32_0 = arith.constant 0 : i32
    %c0_i32_1 = arith.constant 0 : i32
    return %c0_i32, %c0_i32_0 : i32, i32
  }
  func.func @transform_8(%arg0: i32) -> (i32, i32) {
    %c0_i32 = arith.constant 0 : i32
    %c0_i32_0 = arith.constant 0 : i32
    %c0_i32_1 = arith.constant 0 : i32
    return %c0_i32, %c0_i32_0 : i32, i32
  }
  func.func @transform_9(%arg0: i32) -> (i32, i32) {
    %c0_i32 = arith.constant 0 : i32
    %c0_i32_0 = arith.constant 0 : i32
    %c0_i32_1 = arith.constant 0 : i32
    return %c0_i32, %c0_i32_0 : i32, i32
  }
  func.func @transform_10(%arg0: i32) -> (i32, i32) {
    %c0_i32 = arith.constant 0 : i32
    %c0_i32_0 = arith.constant 0 : i32
    %c0_i32_1 = arith.constant 0 : i32
    return %c0_i32, %c0_i32_0 : i32, i32
  }
  func.func @transform_11(%arg0: i32) -> (i32, i32) {
    %c0_i32 = arith.constant 0 : i32
    %c0_i32_0 = arith.constant 0 : i32
    %c0_i32_1 = arith.constant 0 : i32
    return %c0_i32, %c0_i32_0 : i32, i32
  }
  func.func @transform_12(%arg0: i32) -> (i32, i32) {
    %c0_i32 = arith.constant 0 : i32
    %c0_i32_0 = arith.constant 0 : i32
    %c0_i32_1 = arith.constant 0 : i32
    return %c0_i32, %c0_i32_0 : i32, i32
  }
  func.func @transform_13(%arg0: i32) -> (i32, i32) {
    %c0_i32 = arith.constant 0 : i32
    %c0_i32_0 = arith.constant 0 : i32
    %c0_i32_1 = arith.constant 0 : i32
    return %c0_i32, %c0_i32_0 : i32, i32
  }
  func.func @transform_14(%arg0: i32) -> (i32, i32) {
    %c0_i32 = arith.constant 0 : i32
    %c0_i32_0 = arith.constant 0 : i32
    %c0_i32_1 = arith.constant 0 : i32
    return %c0_i32, %c0_i32_0 : i32, i32
  }
  func.func @transform_15(%arg0: i32) -> (i32, i32) {
    %c0_i32 = arith.constant 0 : i32
    %c0_i32_0 = arith.constant 0 : i32
    %c0_i32_1 = arith.constant 0 : i32
    return %c0_i32, %c0_i32_0 : i32, i32
  }
  func.func @transform_16(%arg0: i32) -> (i32, i32) {
    %c0_i32 = arith.constant 0 : i32
    %c0_i32_0 = arith.constant 0 : i32
    %c0_i32_1 = arith.constant 0 : i32
    return %c0_i32, %c0_i32_0 : i32, i32
  }
  func.func @transform_17(%arg0: i32) -> (i32, i32) {
    %c0_i32 = arith.constant 0 : i32
    %c0_i32_0 = arith.constant 0 : i32
    %c0_i32_1 = arith.constant 0 : i32
    return %c0_i32, %c0_i32_0 : i32, i32
  }
  func.func @transform_18(%arg0: i32) -> (i32, i32) {
    %c0_i32 = arith.constant 0 : i32
    %c0_i32_0 = arith.constant 0 : i32
    %c0_i32_1 = arith.constant 0 : i32
    return %c0_i32, %c0_i32_0 : i32, i32
  }
  func.func @transform_19(%arg0: i32) -> (i32, i32) {
    %c0_i32 = arith.constant 0 : i32
    %c0_i32_0 = arith.constant 0 : i32
    %c0_i32_1 = arith.constant 0 : i32
    return %c0_i32, %c0_i32_0 : i32, i32
  }
  func.func @transform_20(%arg0: i32) -> (i32, i32) {
    %c0_i32 = arith.constant 0 : i32
    %c0_i32_0 = arith.constant 0 : i32
    %c0_i32_1 = arith.constant 0 : i32
    return %c0_i32, %c0_i32_0 : i32, i32
  }
  func.func @transform_21(%arg0: i32) -> (i32, i32) {
    %c0_i32 = arith.constant 0 : i32
    %c0_i32_0 = arith.constant 0 : i32
    %c0_i32_1 = arith.constant 0 : i32
    return %c0_i32, %c0_i32_0 : i32, i32
  }
  func.func @transform_22(%arg0: i32) -> (i32, i32) {
    %c0_i32 = arith.constant 0 : i32
    %c0_i32_0 = arith.constant 0 : i32
    %c0_i32_1 = arith.constant 0 : i32
    return %c0_i32, %c0_i32_0 : i32, i32
  }
  func.func @transform_23(%arg0: i32) -> (i32, i32) {
    %c0_i32 = arith.constant 0 : i32
    %c0_i32_0 = arith.constant 0 : i32
    %c0_i32_1 = arith.constant 0 : i32
    return %c0_i32, %c0_i32_0 : i32, i32
  }
  func.func @transform_24(%arg0: i32) -> (i32, i32) {
    %c0_i32 = arith.constant 0 : i32
    %c0_i32_0 = arith.constant 0 : i32
    %c0_i32_1 = arith.constant 0 : i32
    return %c0_i32, %c0_i32_0 : i32, i32
  }
  func.func @transform_25(%arg0: i32) -> (i32, i32) {
    %c0_i32 = arith.constant 0 : i32
    %c0_i32_0 = arith.constant 0 : i32
    return %arg0, %c0_i32 : i32, i32
  }
}

</mosaic_0001>

<llo_original>
// kernel: mtbnn_forward.1
$region0: #{mtbnn_forward.1}
  #allocation0 [shape = 'u32[]', space=smem, size = 0x4, offset = 0x4, fixed_abs, tag = 'smem constant byte address 0x4 - core index']
  #allocation1 [shape = 'u32[144,128]{1,0:T(1,128)}', space=vmem, size = 0x12000, scoped, tag = 'internal scratch']
  %s0 = inlined_call_operand.hbm [shape: f32[8,32], index: 0, kind: input, shape index: {}]
  %s1 = inlined_call_operand.vmem [shape: f32[32,256], index: 1, kind: input, shape index: {}]
  %s2 = inlined_call_operand.vmem [shape: f32[32,256], index: 2, kind: input, shape index: {}]
  %s3 = inlined_call_operand.vmem [shape: f32[32,256], index: 3, kind: input, shape index: {}]
  %s4 = inlined_call_operand.hbm [shape: f32[1,256], index: 4, kind: input, shape index: {}]
  %s5 = inlined_call_operand.hbm [shape: f32[1,256], index: 5, kind: input, shape index: {}]
  %s6 = inlined_call_operand.vmem [shape: f32[1,256], index: 6, kind: input, shape index: {}]
  %s7 = inlined_call_operand.vmem [shape: f32[256,128], index: 7, kind: input, shape index: {}]
  %s8 = inlined_call_operand.vmem [shape: f32[256,128], index: 8, kind: input, shape index: {}]
  %s9 = inlined_call_operand.vmem [shape: f32[256,128], index: 9, kind: input, shape index: {}]
  %s10 = inlined_call_operand.hbm [shape: f32[1,128], index: 10, kind: input, shape index: {}]
  %s11 = inlined_call_operand.hbm [shape: f32[1,128], index: 11, kind: input, shape index: {}]
  %s12 = inlined_call_operand.vmem [shape: f32[1,128], index: 12, kind: input, shape index: {}]
  %s13 = inlined_call_operand.vmem [shape: f32[128,128], index: 13, kind: input, shape index: {}]
  %s14 = inlined_call_operand.vmem [shape: f32[128,128], index: 14, kind: input, shape index: {}]
  %s15 = inlined_call_operand.vmem [shape: f32[128,128], index: 15, kind: input, shape index: {}]
  %s16 = inlined_call_operand.hbm [shape: f32[1,128], index: 16, kind: input, shape index: {}]
  %s17 = inlined_call_operand.hbm [shape: f32[1,128], index: 17, kind: input, shape index: {}]
  %s18 = inlined_call_operand.vmem [shape: f32[1,128], index: 18, kind: input, shape index: {}]
  %s19 = inlined_call_operand.vmem [shape: f32[128,128], index: 19, kind: input, shape index: {}]
  %s20 = inlined_call_operand.hbm [shape: f32[128,128], index: 20, kind: input, shape index: {}]
  %s21 = inlined_call_operand.vmem [shape: f32[128,128], index: 21, kind: input, shape index: {}]
  %s22 = inlined_call_operand.hbm [shape: f32[1,128], index: 22, kind: input, shape index: {}]
  %s23 = inlined_call_operand.hbm [shape: f32[1,128], index: 23, kind: input, shape index: {}]
  %s24 = inlined_call_operand.vmem [shape: f32[1,128], index: 24, kind: input, shape index: {}]
  %s25 = inlined_call_operand.vmem [shape: f32[8,128], index: 25, kind: output, shape index: {}]
  %s26 = sld [smem:[#allocation0]]
  $region150: #{mtbnn_forward.1} parent=0
    _
  %s28 = ssub.s32 1, %s26
  %s29 = scalar_select 0, %s28, %s26
  $region1: #{mtbnn_forward.1} parent=0
    #allocation2 [shape = 'u8[4096]{0}', space=vmem, size = 0x1000, scoped, tag = 'input window, operand 0, single buffered']
    #allocation3 [shape = 's32[1]{0}', space=sflag, size = 0x4, scoped, tag = 'scoped memory for mtbnn_forward.1']
    #allocation4 [shape = 'u8[1024]{0}', space=vmem, size = 0x400, scoped, tag = 'input window, operand 4, single buffered']
    #allocation5 [shape = 's32[1]{0}', space=sflag, size = 0x4, scoped, tag = 'scoped memory for mtbnn_forward.1']
    #allocation6 [shape = 'u8[1024]{0}', space=vmem, size = 0x400, scoped, tag = 'input window, operand 5, single buffered']
    #allocation7 [shape = 'u8[512]{0}', space=vmem, size = 0x400, scoped, tag = 'input window, operand 10, single buffered']
    #allocation8 [shape = 's32[1]{0}', space=sflag, size = 0x4, scoped, tag = 'scoped memory for mtbnn_forward.1']
    #allocation9 [shape = 'u8[512]{0}', space=vmem, size = 0x400, scoped, tag = 'input window, operand 11, single buffered']
    #allocation10 [shape = 'u8[512]{0}', space=vmem, size = 0x400, scoped, tag = 'input window, operand 16, single buffered']
    #allocation11 [shape = 's32[1]{0}', space=sflag, size = 0x4, scoped, tag = 'scoped memory for mtbnn_forward.1']
    #allocation12 [shape = 'u8[512]{0}', space=vmem, size = 0x400, scoped, tag = 'input window, operand 17, single buffered']
    #allocation13 [shape = 'u8[65536]{0}', space=vmem, size = 0x10000, scoped, tag = 'input window, operand 20, single buffered']
    #allocation14 [shape = 's32[1]{0}', space=sflag, size = 0x4, scoped, tag = 'scoped memory for mtbnn_forward.1']
    #allocation15 [shape = 'u8[512]{0}', space=vmem, size = 0x400, scoped, tag = 'input window, operand 22, single buffered']
    #allocation16 [shape = 'u8[512]{0}', space=vmem, size = 0x400, scoped, tag = 'input window, operand 23, single buffered']
    #allocation17 [shape = 's32[1]{0}', space=sflag, size = 0x4, scoped, tag = 'scoped memory for mtbnn_forward.1']
    %30 = vsyncpa [#allocation3], 0
    %31 = vsyncpa [#allocation5], 0
    %32 = vsyncpa [#allocation8], 0
    %33 = vsyncpa [#allocation11], 0
    %34 = vsyncpa [#allocation14], 0
    %35 = vsyncpa [#allocation17], 0
    // Predicated region
    $region2: #{mtbnn_forward.1} parent=1 // pred_check
      _
    $region3: #{mtbnn_forward.1} parent=1 // pred_check_branch
      %37 = sbr.rel (0) target = $region5
    $region4: #{mtbnn_forward.1} parent=1 // pred_region
      %s39 = ssub.s32 128, 128
      %40 = vsyncadd [#allocation3], %s39
      %s42 = sshll.u32 [#allocation2], 4
      %s43 = int_to_ptr.vmem [resolvable:$true] %s42
      %45 = dma.hbm_to_vmem [thread:$0]  %s0, 128, %s43, [#allocation3]
    $region5: #{mtbnn_forward.1} parent=1 // pred_fallthru
      _
    // Predicated region
    $region6: #{mtbnn_forward.1} parent=1 // pred_check
      _
    $region7: #{mtbnn_forward.1} parent=1 // pred_check_branch
      %47 = sbr.rel (0) target = $region9
    $region8: #{mtbnn_forward.1} parent=1 // pred_region
      _
    $region9: #{mtbnn_forward.1} parent=1 // pred_fallthru
      _
    // Predicated region
    $region10: #{mtbnn_forward.1} parent=1 // pred_check
      _
    $region11: #{mtbnn_forward.1} parent=1 // pred_check_branch
      %49 = sbr.rel (0) target = $region13
    $region12: #{mtbnn_forward.1} parent=1 // pred_region
      _
    $region13: #{mtbnn_forward.1} parent=1 // pred_fallthru
      _
    // Predicated region
    $region14: #{mtbnn_forward.1} parent=1 // pred_check
      _
    $region15: #{mtbnn_forward.1} parent=1 // pred_check_branch
      %51 = sbr.rel (0) target = $region17
    $region16: #{mtbnn_forward.1} parent=1 // pred_region
      _
    $region17: #{mtbnn_forward.1} parent=1 // pred_fallthru
      _
    // Predicated region
    $region18: #{mtbnn_forward.1} parent=1 // pred_check
      _
    $region19: #{mtbnn_forward.1} parent=1 // pred_check_branch
      %53 = sbr.rel (0) target = $region21
    $region20: #{mtbnn_forward.1} parent=1 // pred_region
      %s55 = ssub.s32 32, 32
      %56 = vsyncadd [#allocation5], %s55
      %s58 = sshll.u32 [#allocation4], 4
      %s59 = int_to_ptr.vmem [resolvable:$true] %s58
      %61 = dma.hbm_to_vmem [thread:$0]  %s4, 32, %s59, [#allocation5]
    $region21: #{mtbnn_forward.1} parent=1 // pred_fallthru
      _
    // Predicated region
    $region22: #{mtbnn_forward.1} parent=1 // pred_check
      _
    $region23: #{mtbnn_forward.1} parent=1 // pred_check_branch
      %63 = sbr.rel (0) target = $region25
    $region24: #{mtbnn_forward.1} parent=1 // pred_region
      %s65 = ssub.s32 32, 32
      %66 = vsyncadd [#allocation5], %s65
      %s68 = sshll.u32 [#allocation6], 4
      %s69 = int_to_ptr.vmem [resolvable:$true] %s68
      %71 = dma.hbm_to_vmem [thread:$0]  %s5, 32, %s69, [#allocation5]
    $region25: #{mtbnn_forward.1} parent=1 // pred_fallthru
      _
    // Predicated region
    $region26: #{mtbnn_forward.1} parent=1 // pred_check
      _
    $region27: #{mtbnn_forward.1} parent=1 // pred_check_branch
      %73 = sbr.rel (0) target = $region29
    $region28: #{mtbnn_forward.1} parent=1 // pred_region
      _
    $region29: #{mtbnn_forward.1} parent=1 // pred_fallthru
      _
    // Predicated region
    $region30: #{mtbnn_forward.1} parent=1 // pred_check
      _
    $region31: #{mtbnn_forward.1} parent=1 // pred_check_branch
      %75 = sbr.rel (0) target = $region33
    $region32: #{mtbnn_forward.1} parent=1 // pred_region
      _
    $region33: #{mtbnn_forward.1} parent=1 // pred_fallthru
      _
    // Predicated region
    $region34: #{mtbnn_forward.1} parent=1 // pred_check
      _
    $region35: #{mtbnn_forward.1} parent=1 // pred_check_branch
      %77 = sbr.rel (0) target = $region37
    $region36: #{mtbnn_forward.1} parent=1 // pred_region
      _
    $region37: #{mtbnn_forward.1} parent=1 // pred_fallthru
      _
    // Predicated region
    $region38: #{mtbnn_forward.1} parent=1 // pred_check
      _
    $region39: #{mtbnn_forward.1} parent=1 // pred_check_branch
      %79 = sbr.rel (0) target = $region41
    $region40: #{mtbnn_forward.1} parent=1 // pred_region
      _
    $region41: #{mtbnn_forward.1} parent=1 // pred_fallthru
      _
    // Predicated region
    $region42: #{mtbnn_forward.1} parent=1 // pred_check
      _
    $region43: #{mtbnn_forward.1} parent=1 // pred_check_branch
      %81 = sbr.rel (0) target = $region45
    $region44: #{mtbnn_forward.1} parent=1 // pred_region
      %s83 = ssub.s32 16, 16
      %84 = vsyncadd [#allocation8], %s83
      %s86 = sshll.u32 [#allocation7], 4
      %s87 = int_to_ptr.vmem [resolvable:$true] %s86
      %89 = dma.hbm_to_vmem [thread:$0]  %s10, 16, %s87, [#allocation8]
    $region45: #{mtbnn_forward.1} parent=1 // pred_fallthru
      _
    // Predicated region
    $region46: #{mtbnn_forward.1} parent=1 // pred_check
      _
    $region47: #{mtbnn_forward.1} parent=1 // pred_check_branch
      %91 = sbr.rel (0) target = $region49
    $region48: #{mtbnn_forward.1} parent=1 // pred_region
      %s93 = ssub.s32 16, 16
      %94 = vsyncadd [#allocation8], %s93
      %s96 = sshll.u32 [#allocation9], 4
      %s97 = int_to_ptr.vmem [resolvable:$true] %s96
      %99 = dma.hbm_to_vmem [thread:$0]  %s11, 16, %s97, [#allocation8]
    $region49: #{mtbnn_forward.1} parent=1 // pred_fallthru
      _
    // Predicated region
    $region50: #{mtbnn_forward.1} parent=1 // pred_check
      _
    $region51: #{mtbnn_forward.1} parent=1 // pred_check_branch
      %101 = sbr.rel (0) target = $region53
    $region52: #{mtbnn_forward.1} parent=1 // pred_region
      _
    $region53: #{mtbnn_forward.1} parent=1 // pred_fallthru
      _
    // Predicated region
    $region54: #{mtbnn_forward.1} parent=1 // pred_check
      _
    $region55: #{mtbnn_forward.1} parent=1 // pred_check_branch
      %103 = sbr.rel (0) target = $region57
    $region56: #{mtbnn_forward.1} parent=1 // pred_region
      _
    $region57: #{mtbnn_forward.1} parent=1 // pred_fallthru
      _
    // Predicated region
    $region58: #{mtbnn_forward.1} parent=1 // pred_check
      _
    $region59: #{mtbnn_forward.1} parent=1 // pred_check_branch
      %105 = sbr.rel (0) target = $region61
    $region60: #{mtbnn_forward.1} parent=1 // pred_region
      _
    $region61: #{mtbnn_forward.1} parent=1 // pred_fallthru
      _
    // Predicated region
    $region62: #{mtbnn_forward.1} parent=1 // pred_check
      _
    $region63: #{mtbnn_forward.1} parent=1 // pred_check_branch
      %107 = sbr.rel (0) target = $region65
    $region64: #{mtbnn_forward.1} parent=1 // pred_region
      _
    $region65: #{mtbnn_forward.1} parent=1 // pred_fallthru
      _
    // Predicated region
    $region66: #{mtbnn_forward.1} parent=1 // pred_check
      _
    $region67: #{mtbnn_forward.1} parent=1 // pred_check_branch
      %109 = sbr.rel (0) target = $region69
    $region68: #{mtbnn_forward.1} parent=1 // pred_region
      %s111 = ssub.s32 16, 16
      %112 = vsyncadd [#allocation11], %s111
      %s114 = sshll.u32 [#allocation10], 4
      %s115 = int_to_ptr.vmem [resolvable:$true] %s114
      %117 = dma.hbm_to_vmem [thread:$0]  %s16, 16, %s115, [#allocation11]
    $region69: #{mtbnn_forward.1} parent=1 // pred_fallthru
      _
    // Predicated region
    $region70: #{mtbnn_forward.1} parent=1 // pred_check
      _
    $region71: #{mtbnn_forward.1} parent=1 // pred_check_branch
      %119 = sbr.rel (0) target = $region73
    $region72: #{mtbnn_forward.1} parent=1 // pred_region
      %s121 = ssub.s32 16, 16
      %122 = vsyncadd [#allocation11], %s121
      %s124 = sshll.u32 [#allocation12], 4
      %s125 = int_to_ptr.vmem [resolvable:$true] %s124
      %127 = dma.hbm_to_vmem [thread:$0]  %s17, 16, %s125, [#allocation11]
    $region73: #{mtbnn_forward.1} parent=1 // pred_fallthru
      _
    // Predicated region
    $region74: #{mtbnn_forward.1} parent=1 // pred_check
      _
    $region75: #{mtbnn_forward.1} parent=1 // pred_check_branch
      %129 = sbr.rel (0) target = $region77
    $region76: #{mtbnn_forward.1} parent=1 // pred_region
      _
    $region77: #{mtbnn_forward.1} parent=1 // pred_fallthru
      _
    // Predicated region
    $region78: #{mtbnn_forward.1} parent=1 // pred_check
      _
    $region79: #{mtbnn_forward.1} parent=1 // pred_check_branch
      %131 = sbr.rel (0) target = $region81
    $region80: #{mtbnn_forward.1} parent=1 // pred_region
      _
    $region81: #{mtbnn_forward.1} parent=1 // pred_fallthru
      _
    // Predicated region
    $region82: #{mtbnn_forward.1} parent=1 // pred_check
      _
    $region83: #{mtbnn_forward.1} parent=1 // pred_check_branch
      %133 = sbr.rel (0) target = $region85
    $region84: #{mtbnn_forward.1} parent=1 // pred_region
      %s135 = ssub.s32 2048, 2048
      %136 = vsyncadd [#allocation14], %s135
      %s137 = sshll.u32 [#allocation13], 4
      %s138 = int_to_ptr.vmem [resolvable:$true] %s137
      %143 = dma.hbm_to_vmem [thread:$0]  %s20, 2048, %s138, [#allocation14], 128, 128, 8
    $region85: #{mtbnn_forward.1} parent=1 // pred_fallthru
      _
    // Predicated region
    $region86: #{mtbnn_forward.1} parent=1 // pred_check
      _
    $region87: #{mtbnn_forward.1} parent=1 // pred_check_branch
      %145 = sbr.rel (0) target = $region89
    $region88: #{mtbnn_forward.1} parent=1 // pred_region
      _
    $region89: #{mtbnn_forward.1} parent=1 // pred_fallthru
      _
    // Predicated region
    $region90: #{mtbnn_forward.1} parent=1 // pred_check
      _
    $region91: #{mtbnn_forward.1} parent=1 // pred_check_branch
      %147 = sbr.rel (0) target = $region93
    $region92: #{mtbnn_forward.1} parent=1 // pred_region
      %s149 = ssub.s32 16, 16
      %150 = vsyncadd [#allocation14], %s149
      %s152 = sshll.u32 [#allocation15], 4
      %s153 = int_to_ptr.vmem [resolvable:$true] %s152
      %155 = dma.hbm_to_vmem [thread:$0]  %s22, 16, %s153, [#allocation14]
    $region93: #{mtbnn_forward.1} parent=1 // pred_fallthru
      _
    // Predicated region
    $region94: #{mtbnn_forward.1} parent=1 // pred_check
      _
    $region95: #{mtbnn_forward.1} parent=1 // pred_check_branch
      %157 = sbr.rel (0) target = $region97
    $region96: #{mtbnn_forward.1} parent=1 // pred_region
      %s159 = ssub.s32 16, 16
      %160 = vsyncadd [#allocation17], %s159
      %s162 = sshll.u32 [#allocation16], 4
      %s163 = int_to_ptr.vmem [resolvable:$true] %s162
      %165 = dma.hbm_to_vmem [thread:$0]  %s23, 16, %s163, [#allocation17]
    $region97: #{mtbnn_forward.1} parent=1 // pred_fallthru
      _
    // Predicated region
    $region98: #{mtbnn_forward.1} parent=1 // pred_check
      _
    $region99: #{mtbnn_forward.1} parent=1 // pred_check_branch
      %167 = sbr.rel (0) target = $region101
    $region100: #{mtbnn_forward.1} parent=1 // pred_region
      _
    $region101: #{mtbnn_forward.1} parent=1 // pred_fallthru
      _
    // Predicated region
    $region102: #{mtbnn_forward.1} parent=1 // pred_check
      _
    $region103: #{mtbnn_forward.1} parent=1 // pred_check_branch
      %169 = sbr.rel (0) target = $region105
    $region104: #{mtbnn_forward.1} parent=1 // pred_region
      %170 = dma.done [#allocation3], 128
    $region105: #{mtbnn_forward.1} parent=1 // pred_fallthru
      _
    // Predicated region
    $region106: #{mtbnn_forward.1} parent=1 // pred_check
      _
    $region107: #{mtbnn_forward.1} parent=1 // pred_check_branch
      %172 = sbr.rel (0) target = $region109
    $region108: #{mtbnn_forward.1} parent=1 // pred_region
      %173 = dma.done [#allocation5], 32
    $region109: #{mtbnn_forward.1} parent=1 // pred_fallthru
      _
    // Predicated region
    $region110: #{mtbnn_forward.1} parent=1 // pred_check
      _
    $region111: #{mtbnn_forward.1} parent=1 // pred_check_branch
      %175 = sbr.rel (0) target = $region113
    $region112: #{mtbnn_forward.1} parent=1 // pred_region
      %176 = dma.done [#allocation5], 32
    $region113: #{mtbnn_forward.1} parent=1 // pred_fallthru
      _
    // Predicated region
    $region114: #{mtbnn_forward.1} parent=1 // pred_check
      _
    $region115: #{mtbnn_forward.1} parent=1 // pred_check_branch
      %178 = sbr.rel (0) target = $region117
    $region116: #{mtbnn_forward.1} parent=1 // pred_region
      %179 = dma.done [#allocation8], 16
    $region117: #{mtbnn_forward.1} parent=1 // pred_fallthru
      _
    // Predicated region
    $region118: #{mtbnn_forward.1} parent=1 // pred_check
      _
    $region119: #{mtbnn_forward.1} parent=1 // pred_check_branch
      %181 = sbr.rel (0) target = $region121
    $region120: #{mtbnn_forward.1} parent=1 // pred_region
      %182 = dma.done [#allocation8], 16
    $region121: #{mtbnn_forward.1} parent=1 // pred_fallthru
      _
    // Predicated region
    $region122: #{mtbnn_forward.1} parent=1 // pred_check
      _
    $region123: #{mtbnn_forward.1} parent=1 // pred_check_branch
      %184 = sbr.rel (0) target = $region125
    $region124: #{mtbnn_forward.1} parent=1 // pred_region
      %185 = dma.done [#allocation11], 16
    $region125: #{mtbnn_forward.1} parent=1 // pred_fallthru
      _
    // Predicated region
    $region126: #{mtbnn_forward.1} parent=1 // pred_check
      _
    $region127: #{mtbnn_forward.1} parent=1 // pred_check_branch
      %187 = sbr.rel (0) target = $region129
    $region128: #{mtbnn_forward.1} parent=1 // pred_region
      %188 = dma.done [#allocation11], 16
    $region129: #{mtbnn_forward.1} parent=1 // pred_fallthru
      _
    // Predicated region
    $region130: #{mtbnn_forward.1} parent=1 // pred_check
      _
    $region131: #{mtbnn_forward.1} parent=1 // pred_check_branch
      %190 = sbr.rel (0) target = $region133
    $region132: #{mtbnn_forward.1} parent=1 // pred_region
      %191 = dma.done [#allocation14], 2048
    $region133: #{mtbnn_forward.1} parent=1 // pred_fallthru
      _
    // Predicated region
    $region134: #{mtbnn_forward.1} parent=1 // pred_check
      _
    $region135: #{mtbnn_forward.1} parent=1 // pred_check_branch
      %193 = sbr.rel (0) target = $region137
    $region136: #{mtbnn_forward.1} parent=1 // pred_region
      %194 = dma.done [#allocation14], 16
    $region137: #{mtbnn_forward.1} parent=1 // pred_fallthru
      _
    // Predicated region
    $region138: #{mtbnn_forward.1} parent=1 // pred_check
      _
    $region139: #{mtbnn_forward.1} parent=1 // pred_check_branch
      %196 = sbr.rel (0) target = $region141
    $region140: #{mtbnn_forward.1} parent=1 // pred_region
      %197 = dma.done [#allocation17], 16
    $region141: #{mtbnn_forward.1} parent=1 // pred_fallthru
      _
    %v198 = vld [vmem:[#allocation2] sm:$0xff]
    %v199 = vld [vmem:[%s1] sm:$0xff]
    %v200 = vld [vmem:[%s1 + $0x8] sm:$0xff]
    %v201 = vld [vmem:[%s1 + $0x10] sm:$0xff]
    %v202 = vld [vmem:[%s1 + $0x18] sm:$0xff]
    %v203 = vld [vmem:[%s1 + $0x20] sm:$0xff]
    %v204 = vld [vmem:[%s1 + $0x28] sm:$0xff]
    %v205 = vld [vmem:[%s1 + $0x30] sm:$0xff]
    %v206 = vld [vmem:[%s1 + $0x38] sm:$0xff]
    %v207 = vld [vmem:[%s2] sm:$0xff]
    %v208 = vld [vmem:[%s2 + $0x8] sm:$0xff]
    %v209 = vld [vmem:[%s2 + $0x10] sm:$0xff]
    %v210 = vld [vmem:[%s2 + $0x18] sm:$0xff]
    %v211 = vld [vmem:[%s2 + $0x20] sm:$0xff]
    %v212 = vld [vmem:[%s2 + $0x28] sm:$0xff]
    %v213 = vld [vmem:[%s2 + $0x30] sm:$0xff]
    %v214 = vld [vmem:[%s2 + $0x38] sm:$0xff]
    %v215 = vld [vmem:[%s3] sm:$0xff]
    %v216 = vld [vmem:[%s3 + $0x8] sm:$0xff]
    %v217 = vld [vmem:[%s3 + $0x10] sm:$0xff]
    %v218 = vld [vmem:[%s3 + $0x18] sm:$0xff]
    %v219 = vld [vmem:[%s3 + $0x20] sm:$0xff]
    %v220 = vld [vmem:[%s3 + $0x28] sm:$0xff]
    %v221 = vld [vmem:[%s3 + $0x30] sm:$0xff]
    %v222 = vld [vmem:[%s3 + $0x38] sm:$0xff]
    %v223 = vmul.f32 %v207, %v215
    %v224 = vmul.f32 %v208, %v216
    %v225 = vmul.f32 %v209, %v217
    %v226 = vmul.f32 %v210, %v218
    %v227 = vmul.f32 %v211, %v219
    %v228 = vmul.f32 %v212, %v220
    %v229 = vmul.f32 %v213, %v221
    %v230 = vmul.f32 %v214, %v222
    %v231 = vadd.f32 %v199, %v223
    %v232 = vadd.f32 %v200, %v224
    %v233 = vadd.f32 %v201, %v225
    %v234 = vadd.f32 %v202, %v226
    %v235 = vadd.f32 %v203, %v227
    %v236 = vadd.f32 %v204, %v228
    %v237 = vadd.f32 %v205, %v229
    %v238 = vadd.f32 %v206, %v230
    %v239 = vld [vmem:[#allocation4] sm:$0x3]
    %v240 = vld [vmem:[#allocation6] sm:$0x3]
    %v241 = vld [vmem:[%s6] sm:$0x3]
    %v242 = vmul.f32 %v240, %v241
    %v243 = vadd.f32 %v239, %v242
    %v245 = vlaneseq
    %v246 = vshrl.u32 %v245, 7
    %v247 = vsub.s32 0, %v246
    %v248 = vrot.slane %v243, %v247
    %v249 = vlaneseq
    %v250 = vshrl.u32 %v249, 7
    %v251 = vsub.s32 1, %v250
    %v252 = vrot.slane %v243, %v251
    %vm255 = vcmask 261120
    %v257 = vsel %vm255, %v198, 0
    %259 = vmatprep.subr.mxu0 %v232
    %260 = vmatpush1.msra.mxu0 %v231
    %261 = vmatprep.subr.mxu0 %v234
    %262 = vmatpush1.msra.mxu0 %v233
    %263 = vmatprep.subr.mxu0 %v236
    %264 = vmatpush1.msra.mxu0 %v235
    %265 = vmatprep.subr.mxu0 %v238
    %266 = vmatpush1.msra.mxu0 %v237
    %267 = vmatprep.subr.mxu0 0.0
    %268 = vmatpush1.msra.mxu0 0.0
    %269 = vmatprep.subr.mxu0 0.0
    %270 = vmatpush1.msra.mxu0 0.0
    %271 = vmatprep.subr.mxu0 0.0
    %272 = vmatpush1.msra.mxu0 0.0
    %273 = vmatprep.subr.mxu0 0.0
    %274 = vmatpush1.msra.mxu0 0.0
    %275 = vmatprep.subr.mxu0 0.0
    %276 = vmatpush1.msra.mxu0 0.0
    %277 = vmatprep.subr.mxu0 0.0
    %278 = vmatpush1.msra.mxu0 0.0
    %279 = vmatprep.subr.mxu0 0.0
    %280 = vmatpush1.msra.mxu0 0.0
    %281 = vmatprep.subr.mxu0 0.0
    %282 = vmatpush1.msra.mxu0 0.0
    %283 = vmatprep.subr.mxu0 0.0
    %284 = vmatpush1.msra.mxu0 0.0
    %285 = vmatprep.subr.mxu0 0.0
    %286 = vmatpush1.msra.mxu0 0.0
    %287 = vmatprep.subr.mxu0 0.0
    %288 = vmatpush1.msra.mxu0 0.0
    %289 = vmatprep.subr.mxu0 0.0
    %290 = vmatpush1.msra.mxu0 0.0
    %291 = vmatprep.subr.mxu0 0.0
    %292 = vmatpush1.msra.mxu0 0.0
    %293 = vmatprep.subr.mxu0 0.0
    %294 = vmatpush1.msra.mxu0 0.0
    %295 = vmatprep.subr.mxu0 0.0
    %296 = vmatpush1.msra.mxu0 0.0
    %297 = vmatprep.subr.mxu0 0.0
    %298 = vmatpush1.msra.mxu0 0.0
    %299 = vmatprep.subr.mxu0 0.0
    %300 = vmatpush1.msra.mxu0 0.0
    %301 = vmatprep.subr.mxu0 0.0
    %302 = vmatpush1.msra.mxu0 0.0
    %303 = vmatprep.subr.mxu0 0.0
    %304 = vmatpush1.msra.mxu0 0.0
    %305 = vmatprep.subr.mxu0 0.0
    %306 = vmatpush1.msra.mxu0 0.0
    %307 = vmatprep.subr.mxu0 0.0
    %308 = vmatpush1.msra.mxu0 0.0
    %309 = vmatprep.subr.mxu0 0.0
    %310 = vmatpush1.msra.mxu0 0.0
    %311 = vmatprep.subr.mxu0 0.0
    %312 = vmatpush1.msra.mxu0 0.0
    %313 = vmatprep.subr.mxu0 0.0
    %314 = vmatpush1.msra.mxu0 0.0
    %315 = vmatprep.subr.mxu0 0.0
    %316 = vmatpush1.msra.mxu0 0.0
    %317 = vmatprep.subr.mxu0 0.0
    %318 = vmatpush1.msra.mxu0 0.0
    %319 = vmatprep.subr.mxu0 0.0
    %320 = vmatpush1.msra.mxu0 0.0
    %321 = vmatprep.subr.mxu0 0.0
    %322 = vmatpush1.msra.mxu0 0.0
    %323 = vmatprep.mubr.f32.mxu0 0.0
    %324 = vmatmul.mubr.f32.gmra.mrb[0].mxu0 %v257
    %v325 = vpop.f32.mrb[0].mxu0
    %v326 = vadd.f32 %v248, %v325
    %v327 = vpop.f32.mrb[0].mxu0
    %v328 = vadd.f32 %v252, %v327
    %329 = vdwg.mxu0
    %v330 = vmax.f32 %v326, 0.0
    %v331 = vmax.f32 %v328, 0.0
    %v332 = vld [vmem:[%s7] sm:$0xff]
    %v333 = vld [vmem:[%s7 + $0x8] sm:$0xff]
    %v334 = vld [vmem:[%s7 + $0x10] sm:$0xff]
    %v335 = vld [vmem:[%s7 + $0x18] sm:$0xff]
    %v336 = vld [vmem:[%s7 + $0x20] sm:$0xff]
    %v337 = vld [vmem:[%s7 + $0x28] sm:$0xff]
    %v338 = vld [vmem:[%s7 + $0x30] sm:$0xff]
    %v339 = vld [vmem:[%s7 + $0x38] sm:$0xff]
    %v340 = vld [vmem:[%s7 + $0x40] sm:$0xff]
    %v341 = vld [vmem:[%s7 + $0x48] sm:$0xff]
    %v342 = vld [vmem:[%s7 + $0x50] sm:$0xff]
    %v343 = vld [vmem:[%s7 + $0x58] sm:$0xff]
    %v344 = vld [vmem:[%s7 + $0x60] sm:$0xff]
    %v345 = vld [vmem:[%s7 + $0x68] sm:$0xff]
    %v346 = vld [vmem:[%s7 + $0x70] sm:$0xff]
    %v347 = vld [vmem:[%s7 + $0x78] sm:$0xff]
    %v348 = vld [vmem:[%s7 + $0x80] sm:$0xff]
    %v349 = vld [vmem:[%s7 + $0x88] sm:$0xff]
    %v350 = vld [vmem:[%s7 + $0x90] sm:$0xff]
    %v351 = vld [vmem:[%s7 + $0x98] sm:$0xff]
    %v352 = vld [vmem:[%s7 + $0xa0] sm:$0xff]
    %v353 = vld [vmem:[%s7 + $0xa8] sm:$0xff]
    %v354 = vld [vmem:[%s7 + $0xb0] sm:$0xff]
    %v355 = vld [vmem:[%s7 + $0xb8] sm:$0xff]
    %v356 = vld [vmem:[%s7 + $0xc0] sm:$0xff]
    %v357 = vld [vmem:[%s7 + $0xc8] sm:$0xff]
    %v358 = vld [vmem:[%s7 + $0xd0] sm:$0xff]
    %v359 = vld [vmem:[%s7 + $0xd8] sm:$0xff]
    %v360 = vld [vmem:[%s7 + $0xe0] sm:$0xff]
    %v361 = vld [vmem:[%s7 + $0xe8] sm:$0xff]
    %v362 = vld [vmem:[%s7 + $0xf0] sm:$0xff]
    %v363 = vld [vmem:[%s7 + $0xf8] sm:$0xff]
    %v364 = vld [vmem:[%s8] sm:$0xff]
    %v365 = vld [vmem:[%s8 + $0x8] sm:$0xff]
    %v366 = vld [vmem:[%s8 + $0x10] sm:$0xff]
    %v367 = vld [vmem:[%s8 + $0x18] sm:$0xff]
    %v368 = vld [vmem:[%s8 + $0x20] sm:$0xff]
    %v369 = vld [vmem:[%s8 + $0x28] sm:$0xff]
    %v370 = vld [vmem:[%s8 + $0x30] sm:$0xff]
    %v371 = vld [vmem:[%s8 + $0x38] sm:$0xff]
    %v372 = vld [vmem:[%s8 + $0x40] sm:$0xff]
    %v373 = vld [vmem:[%s8 + $0x48] sm:$0xff]
    %v374 = vld [vmem:[%s8 + $0x50] sm:$0xff]
    %v375 = vld [vmem:[%s8 + $0x58] sm:$0xff]
    %v376 = vld [vmem:[%s8 + $0x60] sm:$0xff]
    %v377 = vld [vmem:[%s8 + $0x68] sm:$0xff]
    %v378 = vld [vmem:[%s8 + $0x70] sm:$0xff]
    %v379 = vld [vmem:[%s8 + $0x78] sm:$0xff]
    %v380 = vld [vmem:[%s8 + $0x80] sm:$0xff]
    %v381 = vld [vmem:[%s8 + $0x88] sm:$0xff]
    %v382 = vld [vmem:[%s8 + $0x90] sm:$0xff]
    %v383 = vld [vmem:[%s8 + $0x98] sm:$0xff]
    %v384 = vld [vmem:[%s8 + $0xa0] sm:$0xff]
    %v385 = vld [vmem:[%s8 + $0xa8] sm:$0xff]
    %v386 = vld [vmem:[%s8 + $0xb0] sm:$0xff]
    %v387 = vld [vmem:[%s8 + $0xb8] sm:$0xff]
    %v388 = vld [vmem:[%s8 + $0xc0] sm:$0xff]
    %v389 = vld [vmem:[%s8 + $0xc8] sm:$0xff]
    %v390 = vld [vmem:[%s8 + $0xd0] sm:$0xff]
    %v391 = vld [vmem:[%s8 + $0xd8] sm:$0xff]
    %v392 = vld [vmem:[%s8 + $0xe0] sm:$0xff]
    %v393 = vld [vmem:[%s8 + $0xe8] sm:$0xff]
    %v394 = vld [vmem:[%s8 + $0xf0] sm:$0xff]
    %v395 = vld [vmem:[%s8 + $0xf8] sm:$0xff]
    %v396 = vld [vmem:[%s9] sm:$0xff]
    %v397 = vld [vmem:[%s9 + $0x8] sm:$0xff]
    %v398 = vld [vmem:[%s9 + $0x10] sm:$0xff]
    %v399 = vld [vmem:[%s9 + $0x18] sm:$0xff]
    %v400 = vld [vmem:[%s9 + $0x20] sm:$0xff]
    %v401 = vld [vmem:[%s9 + $0x28] sm:$0xff]
    %v402 = vld [vmem:[%s9 + $0x30] sm:$0xff]
    %v403 = vld [vmem:[%s9 + $0x38] sm:$0xff]
    %v404 = vld [vmem:[%s9 + $0x40] sm:$0xff]
    %v405 = vld [vmem:[%s9 + $0x48] sm:$0xff]
    %v406 = vld [vmem:[%s9 + $0x50] sm:$0xff]
    %v407 = vld [vmem:[%s9 + $0x58] sm:$0xff]
    %v408 = vld [vmem:[%s9 + $0x60] sm:$0xff]
    %v409 = vld [vmem:[%s9 + $0x68] sm:$0xff]
    %v410 = vld [vmem:[%s9 + $0x70] sm:$0xff]
    %v411 = vld [vmem:[%s9 + $0x78] sm:$0xff]
    %v412 = vld [vmem:[%s9 + $0x80] sm:$0xff]
    %v413 = vld [vmem:[%s9 + $0x88] sm:$0xff]
    %v414 = vld [vmem:[%s9 + $0x90] sm:$0xff]
    %v415 = vld [vmem:[%s9 + $0x98] sm:$0xff]
    %v416 = vld [vmem:[%s9 + $0xa0] sm:$0xff]
    %v417 = vld [vmem:[%s9 + $0xa8] sm:$0xff]
    %v418 = vld [vmem:[%s9 + $0xb0] sm:$0xff]
    %v419 = vld [vmem:[%s9 + $0xb8] sm:$0xff]
    %v420 = vld [vmem:[%s9 + $0xc0] sm:$0xff]
    %v421 = vld [vmem:[%s9 + $0xc8] sm:$0xff]
    %v422 = vld [vmem:[%s9 + $0xd0] sm:$0xff]
    %v423 = vld [vmem:[%s9 + $0xd8] sm:$0xff]
    %v424 = vld [vmem:[%s9 + $0xe0] sm:$0xff]
    %v425 = vld [vmem:[%s9 + $0xe8] sm:$0xff]
    %v426 = vld [vmem:[%s9 + $0xf0] sm:$0xff]
    %v427 = vld [vmem:[%s9 + $0xf8] sm:$0xff]
    %v428 = vmul.f32 %v364, %v396
    %v429 = vmul.f32 %v365, %v397
    %v430 = vmul.f32 %v366, %v398
    %v431 = vmul.f32 %v367, %v399
    %v432 = vmul.f32 %v368, %v400
    %v433 = vmul.f32 %v369, %v401
    %v434 = vmul.f32 %v370, %v402
    %v435 = vmul.f32 %v371, %v403
    %v436 = vmul.f32 %v372, %v404
    %v437 = vmul.f32 %v373, %v405
    %v438 = vmul.f32 %v374, %v406
    %v439 = vmul.f32 %v375, %v407
    %v440 = vmul.f32 %v376, %v408
    %v441 = vmul.f32 %v377, %v409
    %v442 = vmul.f32 %v378, %v410
    %v443 = vmul.f32 %v379, %v411
    %v444 = vmul.f32 %v380, %v412
    %v445 = vmul.f32 %v381, %v413
    %v446 = vmul.f32 %v382, %v414
    %v447 = vmul.f32 %v383, %v415
    %v448 = vmul.f32 %v384, %v416
    %v449 = vmul.f32 %v385, %v417
    %v450 = vmul.f32 %v386, %v418
    %v451 = vmul.f32 %v387, %v419
    %v452 = vmul.f32 %v388, %v420
    %v453 = vmul.f32 %v389, %v421
    %v454 = vmul.f32 %v390, %v422
    %v455 = vmul.f32 %v391, %v423
    %v456 = vmul.f32 %v392, %v424
    %v457 = vmul.f32 %v393, %v425
    %v458 = vmul.f32 %v394, %v426
    %v459 = vmul.f32 %v395, %v427
    %v460 = vadd.f32 %v332, %v428
    %v461 = vadd.f32 %v333, %v429
    %v462 = vadd.f32 %v334, %v430
    %v463 = vadd.f32 %v335, %v431
    %v464 = vadd.f32 %v336, %v432
    %v465 = vadd.f32 %v337, %v433
    %v466 = vadd.f32 %v338, %v434
    %v467 = vadd.f32 %v339, %v435
    %v468 = vadd.f32 %v340, %v436
    %v469 = vadd.f32 %v341, %v437
    %v470 = vadd.f32 %v342, %v438
    %v471 = vadd.f32 %v343, %v439
    %v472 = vadd.f32 %v344, %v440
    %v473 = vadd.f32 %v345, %v441
    %v474 = vadd.f32 %v346, %v442
    %v475 = vadd.f32 %v347, %v443
    %v476 = vadd.f32 %v348, %v444
    %v477 = vadd.f32 %v349, %v445
    %v478 = vadd.f32 %v350, %v446
    %v479 = vadd.f32 %v351, %v447
    %v480 = vadd.f32 %v352, %v448
    %v481 = vadd.f32 %v353, %v449
    %v482 = vadd.f32 %v354, %v450
    %v483 = vadd.f32 %v355, %v451
    %v484 = vadd.f32 %v356, %v452
    %v485 = vadd.f32 %v357, %v453
    %v486 = vadd.f32 %v358, %v454
    %v487 = vadd.f32 %v359, %v455
    %v488 = vadd.f32 %v360, %v456
    %v489 = vadd.f32 %v361, %v457
    %v490 = vadd.f32 %v362, %v458
    %v491 = vadd.f32 %v363, %v459
    %v492 = vld [vmem:[#allocation7] sm:$0x1]
    %v493 = vld [vmem:[#allocation9] sm:$0x1]
    %v494 = vld [vmem:[%s12] sm:$0x1]
    %v495 = vmul.f32 %v493, %v494
    %v496 = vadd.f32 %v492, %v495
    %v498 = vlaneseq
    %v499 = vshrl.u32 %v498, 7
    %v500 = vsub.s32 0, %v499
    %v501 = vrot.slane %v496, %v500
    %503 = vmatprep.subr.mxu0 0.0
    %504 = vmatpush1.msra.mxu0 %v460
    %505 = vmatprep.subr.mxu0 0.0
    %506 = vmatpush1.msra.mxu0 %v461
    %507 = vmatprep.subr.mxu0 0.0
    %508 = vmatpush1.msra.mxu0 %v462
    %509 = vmatprep.subr.mxu0 0.0
    %510 = vmatpush1.msra.mxu0 %v463
    %511 = vmatprep.subr.mxu0 0.0
    %512 = vmatpush1.msra.mxu0 %v464
    %513 = vmatprep.subr.mxu0 0.0
    %514 = vmatpush1.msra.mxu0 %v465
    %515 = vmatprep.subr.mxu0 0.0
    %516 = vmatpush1.msra.mxu0 %v466
    %517 = vmatprep.subr.mxu0 0.0
    %518 = vmatpush1.msra.mxu0 %v467
    %519 = vmatprep.subr.mxu0 0.0
    %520 = vmatpush1.msra.mxu0 %v468
    %521 = vmatprep.subr.mxu0 0.0
    %522 = vmatpush1.msra.mxu0 %v469
    %523 = vmatprep.subr.mxu0 0.0
    %524 = vmatpush1.msra.mxu0 %v470
    %525 = vmatprep.subr.mxu0 0.0
    %526 = vmatpush1.msra.mxu0 %v471
    %527 = vmatprep.subr.mxu0 0.0
    %528 = vmatpush1.msra.mxu0 %v472
    %529 = vmatprep.subr.mxu0 0.0
    %530 = vmatpush1.msra.mxu0 %v473
    %531 = vmatprep.subr.mxu0 0.0
    %532 = vmatpush1.msra.mxu0 %v474
    %533 = vmatprep.subr.mxu0 0.0
    %534 = vmatpush1.msra.mxu0 %v475
    %535 = vmatprep.subr.mxu0 0.0
    %536 = vmatpush1.msra.mxu0 %v476
    %537 = vmatprep.subr.mxu0 0.0
    %538 = vmatpush1.msra.mxu0 %v477
    %539 = vmatprep.subr.mxu0 0.0
    %540 = vmatpush1.msra.mxu0 %v478
    %541 = vmatprep.subr.mxu0 0.0
    %542 = vmatpush1.msra.mxu0 %v479
    %543 = vmatprep.subr.mxu0 0.0
    %544 = vmatpush1.msra.mxu0 %v480
    %545 = vmatprep.subr.mxu0 0.0
    %546 = vmatpush1.msra.mxu0 %v481
    %547 = vmatprep.subr.mxu0 0.0
    %548 = vmatpush1.msra.mxu0 %v482
    %549 = vmatprep.subr.mxu0 0.0
    %550 = vmatpush1.msra.mxu0 %v483
    %551 = vmatprep.subr.mxu0 0.0
    %552 = vmatpush1.msra.mxu0 %v484
    %553 = vmatprep.subr.mxu0 0.0
    %554 = vmatpush1.msra.mxu0 %v485
    %555 = vmatprep.subr.mxu0 0.0
    %556 = vmatpush1.msra.mxu0 %v486
    %557 = vmatprep.subr.mxu0 0.0
    %558 = vmatpush1.msra.mxu0 %v487
    %559 = vmatprep.subr.mxu0 0.0
    %560 = vmatpush1.msra.mxu0 %v488
    %561 = vmatprep.subr.mxu0 0.0
    %562 = vmatpush1.msra.mxu0 %v489
    %563 = vmatprep.subr.mxu0 0.0
    %564 = vmatpush1.msra.mxu0 %v490
    %565 = vmatprep.subr.mxu0 0.0
    %566 = vmatpush1.msra.mxu0 %v491
    %567 = vmatprep.mubr.f32.mxu0 %v331
    %568 = vmatmul.mubr.f32.gmra.mrb[0].mxu0 %v330
    %v569 = vpop.f32.mrb[0].mxu0
    %v570 = vadd.f32 %v501, %v569
    %v571 = vpop.f32.mrb[0].mxu0
    %572 = vdwg.mxu0
    %v573 = vmax.f32 %v570, 0.0
    %v574 = vld [vmem:[%s13] sm:$0xff]
    %v575 = vld [vmem:[%s13 + $0x8] sm:$0xff]
    %v576 = vld [vmem:[%s13 + $0x10] sm:$0xff]
    %v577 = vld [vmem:[%s13 + $0x18] sm:$0xff]
    %v578 = vld [vmem:[%s13 + $0x20] sm:$0xff]
    %v579 = vld [vmem:[%s13 + $0x28] sm:$0xff]
    %v580 = vld [vmem:[%s13 + $0x30] sm:$0xff]
    %v581 = vld [vmem:[%s13 + $0x38] sm:$0xff]
    %v582 = vld [vmem:[%s13 + $0x40] sm:$0xff]
    %v583 = vld [vmem:[%s13 + $0x48] sm:$0xff]
    %v584 = vld [vmem:[%s13 + $0x50] sm:$0xff]
    %v585 = vld [vmem:[%s13 + $0x58] sm:$0xff]
    %v586 = vld [vmem:[%s13 + $0x60] sm:$0xff]
    %v587 = vld [vmem:[%s13 + $0x68] sm:$0xff]
    %v588 = vld [vmem:[%s13 + $0x70] sm:$0xff]
    %v589 = vld [vmem:[%s13 + $0x78] sm:$0xff]
    %v590 = vld [vmem:[%s14] sm:$0xff]
    %v591 = vld [vmem:[%s14 + $0x8] sm:$0xff]
    %v592 = vld [vmem:[%s14 + $0x10] sm:$0xff]
    %v593 = vld [vmem:[%s14 + $0x18] sm:$0xff]
    %v594 = vld [vmem:[%s14 + $0x20] sm:$0xff]
    %v595 = vld [vmem:[%s14 + $0x28] sm:$0xff]
    %v596 = vld [vmem:[%s14 + $0x30] sm:$0xff]
    %v597 = vld [vmem:[%s14 + $0x38] sm:$0xff]
    %v598 = vld [vmem:[%s14 + $0x40] sm:$0xff]
    %v599 = vld [vmem:[%s14 + $0x48] sm:$0xff]
    %v600 = vld [vmem:[%s14 + $0x50] sm:$0xff]
    %v601 = vld [vmem:[%s14 + $0x58] sm:$0xff]
    %v602 = vld [vmem:[%s14 + $0x60] sm:$0xff]
    %v603 = vld [vmem:[%s14 + $0x68] sm:$0xff]
    %v604 = vld [vmem:[%s14 + $0x70] sm:$0xff]
    %v605 = vld [vmem:[%s14 + $0x78] sm:$0xff]
    %v606 = vld [vmem:[%s15] sm:$0xff]
    %v607 = vld [vmem:[%s15 + $0x8] sm:$0xff]
    %v608 = vld [vmem:[%s15 + $0x10] sm:$0xff]
    %v609 = vld [vmem:[%s15 + $0x18] sm:$0xff]
    %v610 = vld [vmem:[%s15 + $0x20] sm:$0xff]
    %v611 = vld [vmem:[%s15 + $0x28] sm:$0xff]
    %v612 = vld [vmem:[%s15 + $0x30] sm:$0xff]
    %v613 = vld [vmem:[%s15 + $0x38] sm:$0xff]
    %v614 = vld [vmem:[%s15 + $0x40] sm:$0xff]
    %v615 = vld [vmem:[%s15 + $0x48] sm:$0xff]
    %v616 = vld [vmem:[%s15 + $0x50] sm:$0xff]
    %v617 = vld [vmem:[%s15 + $0x58] sm:$0xff]
    %v618 = vld [vmem:[%s15 + $0x60] sm:$0xff]
    %v619 = vld [vmem:[%s15 + $0x68] sm:$0xff]
    %v620 = vld [vmem:[%s15 + $0x70] sm:$0xff]
    %v621 = vld [vmem:[%s15 + $0x78] sm:$0xff]
    %v622 = vmul.f32 %v590, %v606
    %v623 = vmul.f32 %v591, %v607
    %v624 = vmul.f32 %v592, %v608
    %v625 = vmul.f32 %v593, %v609
    %v626 = vmul.f32 %v594, %v610
    %v627 = vmul.f32 %v595, %v611
    %v628 = vmul.f32 %v596, %v612
    %v629 = vmul.f32 %v597, %v613
    %v630 = vmul.f32 %v598, %v614
    %v631 = vmul.f32 %v599, %v615
    %v632 = vmul.f32 %v600, %v616
    %v633 = vmul.f32 %v601, %v617
    %v634 = vmul.f32 %v602, %v618
    %v635 = vmul.f32 %v603, %v619
    %v636 = vmul.f32 %v604, %v620
    %v637 = vmul.f32 %v605, %v621
    %v638 = vadd.f32 %v574, %v622
    %v639 = vadd.f32 %v575, %v623
    %v640 = vadd.f32 %v576, %v624
    %v641 = vadd.f32 %v577, %v625
    %v642 = vadd.f32 %v578, %v626
    %v643 = vadd.f32 %v579, %v627
    %v644 = vadd.f32 %v580, %v628
    %v645 = vadd.f32 %v581, %v629
    %v646 = vadd.f32 %v582, %v630
    %v647 = vadd.f32 %v583, %v631
    %v648 = vadd.f32 %v584, %v632
    %v649 = vadd.f32 %v585, %v633
    %v650 = vadd.f32 %v586, %v634
    %v651 = vadd.f32 %v587, %v635
    %v652 = vadd.f32 %v588, %v636
    %v653 = vadd.f32 %v589, %v637
    %v654 = vld [vmem:[#allocation10] sm:$0x1]
    %v655 = vld [vmem:[#allocation12] sm:$0x1]
    %v656 = vld [vmem:[%s18] sm:$0x1]
    %v657 = vmul.f32 %v655, %v656
    %v658 = vadd.f32 %v654, %v657
    %v660 = vlaneseq
    %v661 = vshrl.u32 %v660, 7
    %v662 = vsub.s32 0, %v661
    %v663 = vrot.slane %v658, %v662
    %665 = vmatprep.subr.mxu0 0.0
    %666 = vmatpush1.msra.mxu0 %v638
    %667 = vmatprep.subr.mxu0 0.0
    %668 = vmatpush1.msra.mxu0 %v639
    %669 = vmatprep.subr.mxu0 0.0
    %670 = vmatpush1.msra.mxu0 %v640
    %671 = vmatprep.subr.mxu0 0.0
    %672 = vmatpush1.msra.mxu0 %v641
    %673 = vmatprep.subr.mxu0 0.0
    %674 = vmatpush1.msra.mxu0 %v642
    %675 = vmatprep.subr.mxu0 0.0
    %676 = vmatpush1.msra.mxu0 %v643
    %677 = vmatprep.subr.mxu0 0.0
    %678 = vmatpush1.msra.mxu0 %v644
    %679 = vmatprep.subr.mxu0 0.0
    %680 = vmatpush1.msra.mxu0 %v645
    %681 = vmatprep.subr.mxu0 0.0
    %682 = vmatpush1.msra.mxu0 %v646
    %683 = vmatprep.subr.mxu0 0.0
    %684 = vmatpush1.msra.mxu0 %v647
    %685 = vmatprep.subr.mxu0 0.0
    %686 = vmatpush1.msra.mxu0 %v648
    %687 = vmatprep.subr.mxu0 0.0
    %688 = vmatpush1.msra.mxu0 %v649
    %689 = vmatprep.subr.mxu0 0.0
    %690 = vmatpush1.msra.mxu0 %v650
    %691 = vmatprep.subr.mxu0 0.0
    %692 = vmatpush1.msra.mxu0 %v651
    %693 = vmatprep.subr.mxu0 0.0
    %694 = vmatpush1.msra.mxu0 %v652
    %695 = vmatprep.subr.mxu0 0.0
    %696 = vmatpush1.msra.mxu0 %v653
    %697 = vmatprep.subr.mxu0 0.0
    %698 = vmatpush1.msra.mxu0 0.0
    %699 = vmatprep.subr.mxu0 0.0
    %700 = vmatpush1.msra.mxu0 0.0
    %701 = vmatprep.subr.mxu0 0.0
    %702 = vmatpush1.msra.mxu0 0.0
    %703 = vmatprep.subr.mxu0 0.0
    %704 = vmatpush1.msra.mxu0 0.0
    %705 = vmatprep.subr.mxu0 0.0
    %706 = vmatpush1.msra.mxu0 0.0
    %707 = vmatprep.subr.mxu0 0.0
    %708 = vmatpush1.msra.mxu0 0.0
    %709 = vmatprep.subr.mxu0 0.0
    %710 = vmatpush1.msra.mxu0 0.0
    %711 = vmatprep.subr.mxu0 0.0
    %712 = vmatpush1.msra.mxu0 0.0
    %713 = vmatprep.subr.mxu0 0.0
    %714 = vmatpush1.msra.mxu0 0.0
    %715 = vmatprep.subr.mxu0 0.0
    %716 = vmatpush1.msra.mxu0 0.0
    %717 = vmatprep.subr.mxu0 0.0
    %718 = vmatpush1.msra.mxu0 0.0
    %719 = vmatprep.subr.mxu0 0.0
    %720 = vmatpush1.msra.mxu0 0.0
    %721 = vmatprep.subr.mxu0 0.0
    %722 = vmatpush1.msra.mxu0 0.0
    %723 = vmatprep.subr.mxu0 0.0
    %724 = vmatpush1.msra.mxu0 0.0
    %725 = vmatprep.subr.mxu0 0.0
    %726 = vmatpush1.msra.mxu0 0.0
    %727 = vmatprep.subr.mxu0 0.0
    %728 = vmatpush1.msra.mxu0 0.0
    %729 = vmatprep.mubr.f32.mxu0 0.0
    %730 = vmatmul.mubr.f32.gmra.mrb[0].mxu0 %v573
    %v731 = vpop.f32.mrb[0].mxu0
    %v732 = vadd.f32 %v663, %v731
    %v733 = vpop.f32.mrb[0].mxu0
    %734 = vdwg.mxu0
    %v735 = vmax.f32 %v732, 0.0
    %v736 = vld [vmem:[%s19] sm:$0xff]
    %v737 = vld [vmem:[%s19 + $0x8] sm:$0xff]
    %v738 = vld [vmem:[%s19 + $0x10] sm:$0xff]
    %v739 = vld [vmem:[%s19 + $0x18] sm:$0xff]
    %v740 = vld [vmem:[%s19 + $0x20] sm:$0xff]
    %v741 = vld [vmem:[%s19 + $0x28] sm:$0xff]
    %v742 = vld [vmem:[%s19 + $0x30] sm:$0xff]
    %v743 = vld [vmem:[%s19 + $0x38] sm:$0xff]
    %v744 = vld [vmem:[%s19 + $0x40] sm:$0xff]
    %v745 = vld [vmem:[%s19 + $0x48] sm:$0xff]
    %v746 = vld [vmem:[%s19 + $0x50] sm:$0xff]
    %v747 = vld [vmem:[%s19 + $0x58] sm:$0xff]
    %v748 = vld [vmem:[%s19 + $0x60] sm:$0xff]
    %v749 = vld [vmem:[%s19 + $0x68] sm:$0xff]
    %v750 = vld [vmem:[%s19 + $0x70] sm:$0xff]
    %v751 = vld [vmem:[%s19 + $0x78] sm:$0xff]
    %v752 = vld [vmem:[#allocation13] sm:$0xff]
    %v753 = vld [vmem:[#allocation13 + $0x8] sm:$0xff]
    %v754 = vld [vmem:[#allocation13 + $0x10] sm:$0xff]
    %v755 = vld [vmem:[#allocation13 + $0x18] sm:$0xff]
    %v756 = vld [vmem:[#allocation13 + $0x20] sm:$0xff]
    %v757 = vld [vmem:[#allocation13 + $0x28] sm:$0xff]
    %v758 = vld [vmem:[#allocation13 + $0x30] sm:$0xff]
    %v759 = vld [vmem:[#allocation13 + $0x38] sm:$0xff]
    %v760 = vld [vmem:[#allocation13 + $0x40] sm:$0xff]
    %v761 = vld [vmem:[#allocation13 + $0x48] sm:$0xff]
    %v762 = vld [vmem:[#allocation13 + $0x50] sm:$0xff]
    %v763 = vld [vmem:[#allocation13 + $0x58] sm:$0xff]
    %v764 = vld [vmem:[#allocation13 + $0x60] sm:$0xff]
    %v765 = vld [vmem:[#allocation13 + $0x68] sm:$0xff]
    %v766 = vld [vmem:[#allocation13 + $0x70] sm:$0xff]
    %v767 = vld [vmem:[#allocation13 + $0x78] sm:$0xff]
    %v768 = vld [vmem:[%s21] sm:$0xff]
    %v769 = vld [vmem:[%s21 + $0x8] sm:$0xff]
    %v770 = vld [vmem:[%s21 + $0x10] sm:$0xff]
    %v771 = vld [vmem:[%s21 + $0x18] sm:$0xff]
    %v772 = vld [vmem:[%s21 + $0x20] sm:$0xff]
    %v773 = vld [vmem:[%s21 + $0x28] sm:$0xff]
    %v774 = vld [vmem:[%s21 + $0x30] sm:$0xff]
    %v775 = vld [vmem:[%s21 + $0x38] sm:$0xff]
    %v776 = vld [vmem:[%s21 + $0x40] sm:$0xff]
    %v777 = vld [vmem:[%s21 + $0x48] sm:$0xff]
    %v778 = vld [vmem:[%s21 + $0x50] sm:$0xff]
    %v779 = vld [vmem:[%s21 + $0x58] sm:$0xff]
    %v780 = vld [vmem:[%s21 + $0x60] sm:$0xff]
    %v781 = vld [vmem:[%s21 + $0x68] sm:$0xff]
    %v782 = vld [vmem:[%s21 + $0x70] sm:$0xff]
    %v783 = vld [vmem:[%s21 + $0x78] sm:$0xff]
    %v784 = vmul.f32 %v752, %v768
    %v785 = vmul.f32 %v753, %v769
    %v786 = vmul.f32 %v754, %v770
    %v787 = vmul.f32 %v755, %v771
    %v788 = vmul.f32 %v756, %v772
    %v789 = vmul.f32 %v757, %v773
    %v790 = vmul.f32 %v758, %v774
    %v791 = vmul.f32 %v759, %v775
    %v792 = vmul.f32 %v760, %v776
    %v793 = vmul.f32 %v761, %v777
    %v794 = vmul.f32 %v762, %v778
    %v795 = vmul.f32 %v763, %v779
    %v796 = vmul.f32 %v764, %v780
    %v797 = vmul.f32 %v765, %v781
    %v798 = vmul.f32 %v766, %v782
    %v799 = vmul.f32 %v767, %v783
    %v800 = vadd.f32 %v736, %v784
    %v801 = vadd.f32 %v737, %v785
    %v802 = vadd.f32 %v738, %v786
    %v803 = vadd.f32 %v739, %v787
    %v804 = vadd.f32 %v740, %v788
    %v805 = vadd.f32 %v741, %v789
    %v806 = vadd.f32 %v742, %v790
    %v807 = vadd.f32 %v743, %v791
    %v808 = vadd.f32 %v744, %v792
    %v809 = vadd.f32 %v745, %v793
    %v810 = vadd.f32 %v746, %v794
    %v811 = vadd.f32 %v747, %v795
    %v812 = vadd.f32 %v748, %v796
    %v813 = vadd.f32 %v749, %v797
    %v814 = vadd.f32 %v750, %v798
    %v815 = vadd.f32 %v751, %v799
    %v816 = vld [vmem:[#allocation15] sm:$0x1]
    %v817 = vld [vmem:[#allocation16] sm:$0x1]
    %v818 = vld [vmem:[%s24] sm:$0x1]
    %v819 = vmul.f32 %v817, %v818
    %v820 = vadd.f32 %v816, %v819
    %v822 = vlaneseq
    %v823 = vshrl.u32 %v822, 7
    %v824 = vsub.s32 0, %v823
    %v825 = vrot.slane %v820, %v824
    %827 = vmatprep.subr.mxu0 0.0
    %828 = vmatpush1.msra.mxu0 %v800
    %829 = vmatprep.subr.mxu0 0.0
    %830 = vmatpush1.msra.mxu0 %v801
    %831 = vmatprep.subr.mxu0 0.0
    %832 = vmatpush1.msra.mxu0 %v802
    %833 = vmatprep.subr.mxu0 0.0
    %834 = vmatpush1.msra.mxu0 %v803
    %835 = vmatprep.subr.mxu0 0.0
    %836 = vmatpush1.msra.mxu0 %v804
    %837 = vmatprep.subr.mxu0 0.0
    %838 = vmatpush1.msra.mxu0 %v805
    %839 = vmatprep.subr.mxu0 0.0
    %840 = vmatpush1.msra.mxu0 %v806
    %841 = vmatprep.subr.mxu0 0.0
    %842 = vmatpush1.msra.mxu0 %v807
    %843 = vmatprep.subr.mxu0 0.0
    %844 = vmatpush1.msra.mxu0 %v808
    %845 = vmatprep.subr.mxu0 0.0
    %846 = vmatpush1.msra.mxu0 %v809
    %847 = vmatprep.subr.mxu0 0.0
    %848 = vmatpush1.msra.mxu0 %v810
    %849 = vmatprep.subr.mxu0 0.0
    %850 = vmatpush1.msra.mxu0 %v811
    %851 = vmatprep.subr.mxu0 0.0
    %852 = vmatpush1.msra.mxu0 %v812
    %853 = vmatprep.subr.mxu0 0.0
    %854 = vmatpush1.msra.mxu0 %v813
    %855 = vmatprep.subr.mxu0 0.0
    %856 = vmatpush1.msra.mxu0 %v814
    %857 = vmatprep.subr.mxu0 0.0
    %858 = vmatpush1.msra.mxu0 %v815
    %859 = vmatprep.subr.mxu0 0.0
    %860 = vmatpush1.msra.mxu0 0.0
    %861 = vmatprep.subr.mxu0 0.0
    %862 = vmatpush1.msra.mxu0 0.0
    %863 = vmatprep.subr.mxu0 0.0
    %864 = vmatpush1.msra.mxu0 0.0
    %865 = vmatprep.subr.mxu0 0.0
    %866 = vmatpush1.msra.mxu0 0.0
    %867 = vmatprep.subr.mxu0 0.0
    %868 = vmatpush1.msra.mxu0 0.0
    %869 = vmatprep.subr.mxu0 0.0
    %870 = vmatpush1.msra.mxu0 0.0
    %871 = vmatprep.subr.mxu0 0.0
    %872 = vmatpush1.msra.mxu0 0.0
    %873 = vmatprep.subr.mxu0 0.0
    %874 = vmatpush1.msra.mxu0 0.0
    %875 = vmatprep.subr.mxu0 0.0
    %876 = vmatpush1.msra.mxu0 0.0
    %877 = vmatprep.subr.mxu0 0.0
    %878 = vmatpush1.msra.mxu0 0.0
    %879 = vmatprep.subr.mxu0 0.0
    %880 = vmatpush1.msra.mxu0 0.0
    %881 = vmatprep.subr.mxu0 0.0
    %882 = vmatpush1.msra.mxu0 0.0
    %883 = vmatprep.subr.mxu0 0.0
    %884 = vmatpush1.msra.mxu0 0.0
    %885 = vmatprep.subr.mxu0 0.0
    %886 = vmatpush1.msra.mxu0 0.0
    %887 = vmatprep.subr.mxu0 0.0
    %888 = vmatpush1.msra.mxu0 0.0
    %889 = vmatprep.subr.mxu0 0.0
    %890 = vmatpush1.msra.mxu0 0.0
    %891 = vmatprep.mubr.f32.mxu0 0.0
    %892 = vmatmul.mubr.f32.gmra.mrb[0].mxu0 %v735
    %v893 = vpop.f32.mrb[0].mxu0
    %v894 = vadd.f32 %v825, %v893
    %v895 = vpop.f32.mrb[0].mxu0
    %896 = vdwg.mxu0
    %897 = vst [vmem:[%s25] sm:$0xff] %v894
    // Predicated region
    $region142: #{mtbnn_forward.1} parent=1 // pred_check
      _
    $region143: #{mtbnn_forward.1} parent=1 // pred_check_branch
      %899 = sbr.rel (0) target = $region145
    $region144: #{mtbnn_forward.1} parent=1 // pred_region
      _
    $region145: #{mtbnn_forward.1} parent=1 // pred_fallthru
      _
    // Predicated region
    $region146: #{mtbnn_forward.1} parent=1 // pred_check
      _
    $region147: #{mtbnn_forward.1} parent=1 // pred_check_branch
      %901 = sbr.rel (0) target = $region149
    $region148: #{mtbnn_forward.1} parent=1 // pred_region
      _
    $region149: #{mtbnn_forward.1} parent=1 // pred_fallthru
      _
    %902 = vsyncpa [#allocation3], 1
    %903 = vsyncpa [#allocation5], 1
    %904 = vsyncpa [#allocation8], 1
    %905 = vsyncpa [#allocation11], 1
    %906 = vsyncpa [#allocation14], 1
    %907 = vsyncpa [#allocation17], 1

</llo_original>
